<compile_context>
chip_gen: v7x
topology: tpu7x:2x2x1
jax: 0.10.0
libtpu: 0.0.40
codegen_flags: <defaults>
</compile_context>

<pallas_src>
import functools

import jax
import jax.numpy as jnp
from jax import lax
from jax.experimental import pallas as pl
from jax.experimental.pallas import tpu as pltpu


def gru_fc_kernel(
    x_ref,       # (T*Bp, I)  time-major, batch-padded, flattened input
    h0_ref,      # (Bp, H)    initial hidden state (batch-padded)
    wi_ref,      # (I, 3H)    fused input-gate weights  [W_ir | W_iz | W_in]^T
    wh_ref,      # (H, 3H)    fused hidden-gate weights [W_hr | W_hz | W_hn]^T
    bi_ref,      # (1, 3H)    b_ih
    bh_ref,      # (1, 3H)    b_hh
    wfc_ref,     # (H, V)     fc weight (pre-transposed)
    bfc_ref,     # (1, V)     fc bias
    y_ref,       # out: (T*Bp, V) logits
    hout_ref,    # out: (Bp, H)   final hidden state
    gi_sc,       # scratch: (T*Bp, 3H) f32  precomputed input-side gate activations
    h_sc,        # scratch: (T*Bp, H)  f32  all hidden states (for the fused fc head)
    *,
    T, Bp, H,
):
    # --- 1) Input projection hoisted out of the recurrence: one big MXU matmul. ---
    gi_sc[...] = (
        jnp.dot(x_ref[...], wi_ref[...], preferred_element_type=jnp.float32)
        + bi_ref[...]
    )

    # Loop-invariant weights / biases: load into vregs once (not per timestep).
    wh = wh_ref[...]
    bh = bh_ref[...]

    # --- 2) Time recurrence: in-kernel unrolled loop, hidden state carried in vregs. ---
    def step(t, h_prev):
        row = pl.multiple_of(t * Bp, Bp)                 # 8-aligned dynamic row offset
        gi = gi_sc[pl.ds(row, Bp), :]                    # (Bp, 3H)
        gh = jnp.dot(h_prev, wh, preferred_element_type=jnp.float32) + bh  # (Bp, 3H)
        r = jax.nn.sigmoid(gi[:, 0:H] + gh[:, 0:H])
        z = jax.nn.sigmoid(gi[:, H:2 * H] + gh[:, H:2 * H])
        n = jnp.tanh(gi[:, 2 * H:3 * H] + r * gh[:, 2 * H:3 * H])
        h_new = (1.0 - z) * n + z * h_prev               # (Bp, H)
        h_sc[pl.ds(row, Bp), :] = h_new                  # stash for the fused fc head
        return h_new

    h_final = lax.fori_loop(0, T, step, h0_ref[...].astype(jnp.float32), unroll=True)

    # --- 3) fc head outside the recurrence: one matmul + one lane-dense store. ---
    logits = (
        jnp.dot(h_sc[...], wfc_ref[...], preferred_element_type=jnp.float32)
        + bfc_ref[...]
    )
    y_ref[...] = logits.astype(y_ref.dtype)
    hout_ref[...] = h_final.astype(hout_ref.dtype)


def rnn_model_forward(x, h0, params):
    """x: (T, B, I) f32, h0: (1, B, H) f32. Returns (logits (T,B,V), h_final (1,B,H))."""
    T, B, I = x.shape
    H = h0.shape[-1]
    V = params["w_fc"].shape[0]
    Bp = ((B + 7) // 8) * 8                              # pad batch to sublane multiple

    # --- wrapper-side glue (XLA): pad batch, flatten time, fuse/transpose weights ---
    x_p = jnp.pad(x, ((0, 0), (0, Bp - B), (0, 0)))      # (T, Bp, I)
    x2d = x_p.reshape(T * Bp, I)                         # (T*Bp, I)
    h0_p = jnp.pad(h0[0], ((0, Bp - B), (0, 0)))         # (Bp, H)

    # PyTorch GRU stacks gates as [r; z; n] along dim 0 of (3H, I)/(3H, H).
    wi = params["w_ih"].T                                # (I, 3H), columns [r | z | n]
    wh = params["w_hh"].T                                # (H, 3H)
    bi = params["b_ih"].reshape(1, 3 * H)
    bh = params["b_hh"].reshape(1, 3 * H)
    wfc = params["w_fc"].T                               # (H, V)
    bfc = params["b_fc"].reshape(1, V)
    # TODO(synk): at production sizes cast wi/wh/wfc/x2d to bf16 (keep f32 accumulation
    # and f32 gate pointwise math) for v6e/v7x MXU rate and halved weight DMA bytes.

    full = lambda shape: pl.BlockSpec(shape, lambda i: tuple(0 for _ in shape))

    grid_spec = pltpu.PrefetchScalarGridSpec(
        num_scalar_prefetch=0,
        grid=(1,),                                       # single step: loop is in-kernel
        in_specs=[
            full((T * Bp, I)),                           # x2d
            full((Bp, H)),                               # h0
            full((I, 3 * H)),                            # wi
            full((H, 3 * H)),                            # wh
            full((1, 3 * H)),                            # bi
            full((1, 3 * H)),                            # bh
            full((H, V)),                                # wfc
            full((1, V)),                                # bfc
        ],
        out_specs=[
            full((T * Bp, V)),                           # logits slab (lane-dense store)
            full((Bp, H)),                               # final hidden
        ],
        scratch_shapes=[
            pltpu.VMEM((T * Bp, 3 * H), jnp.float32),    # GI precompute
            pltpu.VMEM((T * Bp, H), jnp.float32),        # all hidden states
        ],
    )

    kernel = functools.partial(gru_fc_kernel, T=T, Bp=Bp, H=H)
    y2d, h_last = pl.pallas_call(
        kernel,
        out_shape=(
            jax.ShapeDtypeStruct((T * Bp, V), jnp.float32),
            jax.ShapeDtypeStruct((Bp, H), jnp.float32),
        ),
        grid_spec=grid_spec,
        compiler_params=pltpu.CompilerParams(
            dimension_semantics=("arbitrary",),
        ),
    )(x2d, h0_p, wi, wh, bi, bh, wfc, bfc)

    logits = y2d.reshape(T, Bp, V)[:, :B, :]             # drop batch padding
    h_final = h_last[None, :B, :]
    return logits, h_final


def reference_forward(x, h0, params):
    """Pure-JAX reference mirroring PyTorch nn.GRU + nn.Linear semantics."""
    H = h0.shape[-1]
    w_ih, w_hh, b_ih, b_hh = params["w_ih"], params["w_hh"], params["b_ih"], params["b_hh"]

    def step(h, x_t):
        gi = x_t @ w_ih.T + b_ih
        gh = h @ w_hh.T + b_hh
        r = jax.nn.sigmoid(gi[:, 0:H] + gh[:, 0:H])
        z = jax.nn.sigmoid(gi[:, H:2 * H] + gh[:, H:2 * H])
        n = jnp.tanh(gi[:, 2 * H:3 * H] + r * gh[:, 2 * H:3 * H])
        h_new = (1.0 - z) * n + z * h
        return h_new, h_new

    h_last, ys = jax.lax.scan(step, h0[0], x)
    logits = ys @ params["w_fc"].T + params["b_fc"]
    return logits, h_last[None]


if __name__ == "__main__":
    # Small shapes consistent with the module: seq=8, batch=4, input=16, hidden=32, vocab=64
    T, B, I, H, V = 8, 4, 16, 32, 64

    key = jax.random.PRNGKey(0)
    keys = jax.random.split(key, 8)
    s = 1.0 / jnp.sqrt(H)
    params = {
        "w_ih": jax.random.uniform(keys[0], (3 * H, I), jnp.float32, -s, s),
        "w_hh": jax.random.uniform(keys[1], (3 * H, H), jnp.float32, -s, s),
        "b_ih": jax.random.uniform(keys[2], (3 * H,), jnp.float32, -s, s),
        "b_hh": jax.random.uniform(keys[3], (3 * H,), jnp.float32, -s, s),
        "w_fc": jax.random.uniform(keys[4], (V, H), jnp.float32, -s, s),
        "b_fc": jax.random.uniform(keys[5], (V,), jnp.float32, -s, s),
    }
    x = jax.random.normal(keys[6], (T, B, I), jnp.float32)
    h0 = jax.random.normal(keys[7], (1, B, H), jnp.float32)

    logits, h_final = rnn_model_forward(x, h0, params)
    jax.block_until_ready((logits, h_final))

    ref_logits, ref_h = reference_forward(x, h0, params)
    assert jnp.allclose(logits, ref_logits, atol=1e-3, rtol=1e-3)
    assert jnp.allclose(h_final, ref_h, atol=1e-3, rtol=1e-3)

    print("KERNEL_OK")
</pallas_src>

<mosaic_0001>
module attributes {stable_mosaic.version = 11 : i64} {
  func.func @gru_fc_kernel(%arg0: i32, %arg1: memref<64x16xf32, #tpu.memory_space<vmem>>, %arg2: memref<8x32xf32, #tpu.memory_space<vmem>>, %arg3: memref<16x96xf32, #tpu.memory_space<vmem>>, %arg4: memref<32x96xf32, #tpu.memory_space<vmem>>, %arg5: memref<1x96xf32, #tpu.memory_space<vmem>>, %arg6: memref<1x96xf32, #tpu.memory_space<vmem>>, %arg7: memref<32x64xf32, #tpu.memory_space<vmem>>, %arg8: memref<1x64xf32, #tpu.memory_space<vmem>>, %arg9: memref<64x64xf32, #tpu.memory_space<vmem>>, %arg10: memref<8x32xf32, #tpu.memory_space<vmem>>, %arg11: memref<64x96xf32, #tpu.memory_space<vmem>>, %arg12: memref<64x32xf32, #tpu.memory_space<vmem>>) attributes {dimension_semantics = [#tpu.dimension_semantics<arbitrary>], iteration_bounds = array<i64: 1>, scalar_prefetch = 0 : i64, scratch_operands = 2 : i64, tpu.core_type = #tpu.core_type<tc>, window_params = [{pipeline_mode = #tpu.pipeline_mode<synchronous>, transform_indices = @transform_0, window_bounds = array<i64: 64, 16>}, {pipeline_mode = #tpu.pipeline_mode<synchronous>, transform_indices = @transform_1, window_bounds = array<i64: 8, 32>}, {pipeline_mode = #tpu.pipeline_mode<synchronous>, transform_indices = @transform_2, window_bounds = array<i64: 16, 96>}, {pipeline_mode = #tpu.pipeline_mode<synchronous>, transform_indices = @transform_3, window_bounds = array<i64: 32, 96>}, {pipeline_mode = #tpu.pipeline_mode<synchronous>, transform_indices = @transform_4, window_bounds = array<i64: 1, 96>}, {pipeline_mode = #tpu.pipeline_mode<synchronous>, transform_indices = @transform_5, window_bounds = array<i64: 1, 96>}, {pipeline_mode = #tpu.pipeline_mode<synchronous>, transform_indices = @transform_6, window_bounds = array<i64: 32, 64>}, {pipeline_mode = #tpu.pipeline_mode<synchronous>, transform_indices = @transform_7, window_bounds = array<i64: 1, 64>}, {pipeline_mode = #tpu.pipeline_mode<synchronous>, transform_indices = @transform_8, window_bounds = array<i64: 64, 64>}, {pipeline_mode = #tpu.pipeline_mode<synchronous>, transform_indices = @transform_9, window_bounds = array<i64: 8, 32>}]} {
    %c0 = arith.constant 0 : index
    %c0_0 = arith.constant 0 : index
    %0 = vector.load %arg1[%c0, %c0_0] : memref<64x16xf32, #tpu.memory_space<vmem>>, vector<64x16xf32>
    %c0_1 = arith.constant 0 : index
    %c0_2 = arith.constant 0 : index
    %1 = vector.load %arg3[%c0_1, %c0_2] : memref<16x96xf32, #tpu.memory_space<vmem>>, vector<16x96xf32>
    %cst = arith.constant dense<0.000000e+00> : vector<64x96xf32>
    %2 = tpu.matmul %0, %1, %cst {dimension_numbers = #tpu.dot_dimension_numbers<[1], [0], [0], [1], [0, 0, 1, 1], [], []>} : vector<64x16xf32>, vector<16x96xf32>, vector<64x96xf32> -> vector<64x96xf32>
    %c0_3 = arith.constant 0 : index
    %c0_4 = arith.constant 0 : index
    %3 = vector.load %arg5[%c0_3, %c0_4] : memref<1x96xf32, #tpu.memory_space<vmem>>, vector<1x96xf32>
    %4 = vector.broadcast %3 : vector<1x96xf32> to vector<64x96xf32>
    %5 = arith.addf %2, %4 : vector<64x96xf32>
    %c0_5 = arith.constant 0 : index
    %c0_6 = arith.constant 0 : index
    %6 = vector.load %arg11[%c0_5, %c0_6] : memref<64x96xf32, #tpu.memory_space<vmem>>, vector<64x96xf32>
    tpu.vector_store %arg11[%c0_5, %c0_6], %5 {strides = array<i32>} : memref<64x96xf32, #tpu.memory_space<vmem>>, vector<64x96xf32>,
    %c0_7 = arith.constant 0 : index
    %c0_8 = arith.constant 0 : index
    %7 = vector.load %arg4[%c0_7, %c0_8] : memref<32x96xf32, #tpu.memory_space<vmem>>, vector<32x96xf32>
    %c0_9 = arith.constant 0 : index
    %c0_10 = arith.constant 0 : index
    %8 = vector.load %arg6[%c0_9, %c0_10] : memref<1x96xf32, #tpu.memory_space<vmem>>, vector<1x96xf32>
    %c0_11 = arith.constant 0 : index
    %c0_12 = arith.constant 0 : index
    %9 = vector.load %arg2[%c0_11, %c0_12] : memref<8x32xf32, #tpu.memory_space<vmem>>, vector<8x32xf32>
    %c0_i32 = arith.constant 0 : i32
    %c8_i32 = arith.constant 8 : i32
    %10 = arith.muli %c0_i32, %c8_i32 : i32
    %11 = tpu.assume_multiple %10, 8 : i32
    %12 = arith.index_cast %11 : i32 to index
    %c0_13 = arith.constant 0 : index
    %13 = vector.load %arg11[%12, %c0_13] : memref<64x96xf32, #tpu.memory_space<vmem>>, vector<8x96xf32>
    %cst_14 = arith.constant dense<0.000000e+00> : vector<8x96xf32>
    %14 = tpu.matmul %9, %7, %cst_14 {dimension_numbers = #tpu.dot_dimension_numbers<[1], [0], [0], [1], [0, 0, 1, 1], [], []>} : vector<8x32xf32>, vector<32x96xf32>, vector<8x96xf32> -> vector<8x96xf32>
    %15 = vector.broadcast %8 : vector<1x96xf32> to vector<8x96xf32>
    %16 = arith.addf %14, %15 : vector<8x96xf32>
    %17 = vector.extract_strided_slice %13 {offsets = [0, 0], sizes = [8, 32], strides = [1, 1]} : vector<8x96xf32> to vector<8x32xf32>
    %18 = vector.extract_strided_slice %16 {offsets = [0, 0], sizes = [8, 32], strides = [1, 1]} : vector<8x96xf32> to vector<8x32xf32>
    %19 = arith.addf %17, %18 : vector<8x32xf32>
    %20 = arith.negf %19 : vector<8x32xf32>
    %21 = math.exp %20 : vector<8x32xf32>
    %cst_15 = arith.constant 1.000000e+00 : f32
    %22 = vector.broadcast %cst_15 : f32 to vector<8x32xf32>
    %23 = arith.addf %22, %21 : vector<8x32xf32>
    %24 = arith.divf %22, %23 : vector<8x32xf32>
    %25 = vector.extract_strided_slice %13 {offsets = [0, 32], sizes = [8, 32], strides = [1, 1]} : vector<8x96xf32> to vector<8x32xf32>
    %26 = vector.extract_strided_slice %16 {offsets = [0, 32], sizes = [8, 32], strides = [1, 1]} : vector<8x96xf32> to vector<8x32xf32>
    %27 = arith.addf %25, %26 : vector<8x32xf32>
    %28 = arith.negf %27 : vector<8x32xf32>
    %29 = math.exp %28 : vector<8x32xf32>
    %cst_16 = arith.constant 1.000000e+00 : f32
    %30 = vector.broadcast %cst_16 : f32 to vector<8x32xf32>
    %31 = arith.addf %30, %29 : vector<8x32xf32>
    %32 = arith.divf %30, %31 : vector<8x32xf32>
    %33 = vector.extract_strided_slice %13 {offsets = [0, 64], sizes = [8, 32], strides = [1, 1]} : vector<8x96xf32> to vector<8x32xf32>
    %34 = vector.extract_strided_slice %16 {offsets = [0, 64], sizes = [8, 32], strides = [1, 1]} : vector<8x96xf32> to vector<8x32xf32>
    %35 = arith.mulf %24, %34 : vector<8x32xf32>
    %36 = arith.addf %33, %35 : vector<8x32xf32>
    %37 = math.tanh %36 : vector<8x32xf32>
    %cst_17 = arith.constant 1.000000e+00 : f32
    %38 = vector.broadcast %cst_17 : f32 to vector<8x32xf32>
    %39 = arith.subf %38, %32 : vector<8x32xf32>
    %40 = arith.mulf %39, %37 : vector<8x32xf32>
    %41 = arith.mulf %32, %9 : vector<8x32xf32>
    %42 = arith.addf %40, %41 : vector<8x32xf32>
    %43 = arith.index_cast %11 : i32 to index
    %c0_18 = arith.constant 0 : index
    %44 = vector.load %arg12[%43, %c0_18] : memref<64x32xf32, #tpu.memory_space<vmem>>, vector<8x32xf32>
    tpu.vector_store %arg12[%43, %c0_18], %42 {strides = array<i32>} : memref<64x32xf32, #tpu.memory_space<vmem>>, vector<8x32xf32>,
    %c1_i32 = arith.constant 1 : i32
    %c8_i32_19 = arith.constant 8 : i32
    %45 = arith.muli %c1_i32, %c8_i32_19 : i32
    %46 = tpu.assume_multiple %45, 8 : i32
    %47 = arith.index_cast %46 : i32 to index
    %c0_20 = arith.constant 0 : index
    %48 = vector.load %arg11[%47, %c0_20] : memref<64x96xf32, #tpu.memory_space<vmem>>, vector<8x96xf32>
    %cst_21 = arith.constant dense<0.000000e+00> : vector<8x96xf32>
    %49 = tpu.matmul %42, %7, %cst_21 {dimension_numbers = #tpu.dot_dimension_numbers<[1], [0], [0], [1], [0, 0, 1, 1], [], []>} : vector<8x32xf32>, vector<32x96xf32>, vector<8x96xf32> -> vector<8x96xf32>
    %50 = vector.broadcast %8 : vector<1x96xf32> to vector<8x96xf32>
    %51 = arith.addf %49, %50 : vector<8x96xf32>
    %52 = vector.extract_strided_slice %48 {offsets = [0, 0], sizes = [8, 32], strides = [1, 1]} : vector<8x96xf32> to vector<8x32xf32>
    %53 = vector.extract_strided_slice %51 {offsets = [0, 0], sizes = [8, 32], strides = [1, 1]} : vector<8x96xf32> to vector<8x32xf32>
    %54 = arith.addf %52, %53 : vector<8x32xf32>
    %55 = arith.negf %54 : vector<8x32xf32>
    %56 = math.exp %55 : vector<8x32xf32>
    %cst_22 = arith.constant 1.000000e+00 : f32
    %57 = vector.broadcast %cst_22 : f32 to vector<8x32xf32>
    %58 = arith.addf %57, %56 : vector<8x32xf32>
    %59 = arith.divf %57, %58 : vector<8x32xf32>
    %60 = vector.extract_strided_slice %48 {offsets = [0, 32], sizes = [8, 32], strides = [1, 1]} : vector<8x96xf32> to vector<8x32xf32>
    %61 = vector.extract_strided_slice %51 {offsets = [0, 32], sizes = [8, 32], strides = [1, 1]} : vector<8x96xf32> to vector<8x32xf32>
    %62 = arith.addf %60, %61 : vector<8x32xf32>
    %63 = arith.negf %62 : vector<8x32xf32>
    %64 = math.exp %63 : vector<8x32xf32>
    %cst_23 = arith.constant 1.000000e+00 : f32
    %65 = vector.broadcast %cst_23 : f32 to vector<8x32xf32>
    %66 = arith.addf %65, %64 : vector<8x32xf32>
    %67 = arith.divf %65, %66 : vector<8x32xf32>
    %68 = vector.extract_strided_slice %48 {offsets = [0, 64], sizes = [8, 32], strides = [1, 1]} : vector<8x96xf32> to vector<8x32xf32>
    %69 = vector.extract_strided_slice %51 {offsets = [0, 64], sizes = [8, 32], strides = [1, 1]} : vector<8x96xf32> to vector<8x32xf32>
    %70 = arith.mulf %59, %69 : vector<8x32xf32>
    %71 = arith.addf %68, %70 : vector<8x32xf32>
    %72 = math.tanh %71 : vector<8x32xf32>
    %cst_24 = arith.constant 1.000000e+00 : f32
    %73 = vector.broadcast %cst_24 : f32 to vector<8x32xf32>
    %74 = arith.subf %73, %67 : vector<8x32xf32>
    %75 = arith.mulf %74, %72 : vector<8x32xf32>
    %76 = arith.mulf %67, %42 : vector<8x32xf32>
    %77 = arith.addf %75, %76 : vector<8x32xf32>
    %78 = arith.index_cast %46 : i32 to index
    %c0_25 = arith.constant 0 : index
    %79 = vector.load %arg12[%78, %c0_25] : memref<64x32xf32, #tpu.memory_space<vmem>>, vector<8x32xf32>
    tpu.vector_store %arg12[%78, %c0_25], %77 {strides = array<i32>} : memref<64x32xf32, #tpu.memory_space<vmem>>, vector<8x32xf32>,
    %c2_i32 = arith.constant 2 : i32
    %c8_i32_26 = arith.constant 8 : i32
    %80 = arith.muli %c2_i32, %c8_i32_26 : i32
    %81 = tpu.assume_multiple %80, 8 : i32
    %82 = arith.index_cast %81 : i32 to index
    %c0_27 = arith.constant 0 : index
    %83 = vector.load %arg11[%82, %c0_27] : memref<64x96xf32, #tpu.memory_space<vmem>>, vector<8x96xf32>
    %cst_28 = arith.constant dense<0.000000e+00> : vector<8x96xf32>
    %84 = tpu.matmul %77, %7, %cst_28 {dimension_numbers = #tpu.dot_dimension_numbers<[1], [0], [0], [1], [0, 0, 1, 1], [], []>} : vector<8x32xf32>, vector<32x96xf32>, vector<8x96xf32> -> vector<8x96xf32>
    %85 = vector.broadcast %8 : vector<1x96xf32> to vector<8x96xf32>
    %86 = arith.addf %84, %85 : vector<8x96xf32>
    %87 = vector.extract_strided_slice %83 {offsets = [0, 0], sizes = [8, 32], strides = [1, 1]} : vector<8x96xf32> to vector<8x32xf32>
    %88 = vector.extract_strided_slice %86 {offsets = [0, 0], sizes = [8, 32], strides = [1, 1]} : vector<8x96xf32> to vector<8x32xf32>
    %89 = arith.addf %87, %88 : vector<8x32xf32>
    %90 = arith.negf %89 : vector<8x32xf32>
    %91 = math.exp %90 : vector<8x32xf32>
    %cst_29 = arith.constant 1.000000e+00 : f32
    %92 = vector.broadcast %cst_29 : f32 to vector<8x32xf32>
    %93 = arith.addf %92, %91 : vector<8x32xf32>
    %94 = arith.divf %92, %93 : vector<8x32xf32>
    %95 = vector.extract_strided_slice %83 {offsets = [0, 32], sizes = [8, 32], strides = [1, 1]} : vector<8x96xf32> to vector<8x32xf32>
    %96 = vector.extract_strided_slice %86 {offsets = [0, 32], sizes = [8, 32], strides = [1, 1]} : vector<8x96xf32> to vector<8x32xf32>
    %97 = arith.addf %95, %96 : vector<8x32xf32>
    %98 = arith.negf %97 : vector<8x32xf32>
    %99 = math.exp %98 : vector<8x32xf32>
    %cst_30 = arith.constant 1.000000e+00 : f32
    %100 = vector.broadcast %cst_30 : f32 to vector<8x32xf32>
    %101 = arith.addf %100, %99 : vector<8x32xf32>
    %102 = arith.divf %100, %101 : vector<8x32xf32>
    %103 = vector.extract_strided_slice %83 {offsets = [0, 64], sizes = [8, 32], strides = [1, 1]} : vector<8x96xf32> to vector<8x32xf32>
    %104 = vector.extract_strided_slice %86 {offsets = [0, 64], sizes = [8, 32], strides = [1, 1]} : vector<8x96xf32> to vector<8x32xf32>
    %105 = arith.mulf %94, %104 : vector<8x32xf32>
    %106 = arith.addf %103, %105 : vector<8x32xf32>
    %107 = math.tanh %106 : vector<8x32xf32>
    %cst_31 = arith.constant 1.000000e+00 : f32
    %108 = vector.broadcast %cst_31 : f32 to vector<8x32xf32>
    %109 = arith.subf %108, %102 : vector<8x32xf32>
    %110 = arith.mulf %109, %107 : vector<8x32xf32>
    %111 = arith.mulf %102, %77 : vector<8x32xf32>
    %112 = arith.addf %110, %111 : vector<8x32xf32>
    %113 = arith.index_cast %81 : i32 to index
    %c0_32 = arith.constant 0 : index
    %114 = vector.load %arg12[%113, %c0_32] : memref<64x32xf32, #tpu.memory_space<vmem>>, vector<8x32xf32>
    tpu.vector_store %arg12[%113, %c0_32], %112 {strides = array<i32>} : memref<64x32xf32, #tpu.memory_space<vmem>>, vector<8x32xf32>,
    %c3_i32 = arith.constant 3 : i32
    %c8_i32_33 = arith.constant 8 : i32
    %115 = arith.muli %c3_i32, %c8_i32_33 : i32
    %116 = tpu.assume_multiple %115, 8 : i32
    %117 = arith.index_cast %116 : i32 to index
    %c0_34 = arith.constant 0 : index
    %118 = vector.load %arg11[%117, %c0_34] : memref<64x96xf32, #tpu.memory_space<vmem>>, vector<8x96xf32>
    %cst_35 = arith.constant dense<0.000000e+00> : vector<8x96xf32>
    %119 = tpu.matmul %112, %7, %cst_35 {dimension_numbers = #tpu.dot_dimension_numbers<[1], [0], [0], [1], [0, 0, 1, 1], [], []>} : vector<8x32xf32>, vector<32x96xf32>, vector<8x96xf32> -> vector<8x96xf32>
    %120 = vector.broadcast %8 : vector<1x96xf32> to vector<8x96xf32>
    %121 = arith.addf %119, %120 : vector<8x96xf32>
    %122 = vector.extract_strided_slice %118 {offsets = [0, 0], sizes = [8, 32], strides = [1, 1]} : vector<8x96xf32> to vector<8x32xf32>
    %123 = vector.extract_strided_slice %121 {offsets = [0, 0], sizes = [8, 32], strides = [1, 1]} : vector<8x96xf32> to vector<8x32xf32>
    %124 = arith.addf %122, %123 : vector<8x32xf32>
    %125 = arith.negf %124 : vector<8x32xf32>
    %126 = math.exp %125 : vector<8x32xf32>
    %cst_36 = arith.constant 1.000000e+00 : f32
    %127 = vector.broadcast %cst_36 : f32 to vector<8x32xf32>
    %128 = arith.addf %127, %126 : vector<8x32xf32>
    %129 = arith.divf %127, %128 : vector<8x32xf32>
    %130 = vector.extract_strided_slice %118 {offsets = [0, 32], sizes = [8, 32], strides = [1, 1]} : vector<8x96xf32> to vector<8x32xf32>
    %131 = vector.extract_strided_slice %121 {offsets = [0, 32], sizes = [8, 32], strides = [1, 1]} : vector<8x96xf32> to vector<8x32xf32>
    %132 = arith.addf %130, %131 : vector<8x32xf32>
    %133 = arith.negf %132 : vector<8x32xf32>
    %134 = math.exp %133 : vector<8x32xf32>
    %cst_37 = arith.constant 1.000000e+00 : f32
    %135 = vector.broadcast %cst_37 : f32 to vector<8x32xf32>
    %136 = arith.addf %135, %134 : vector<8x32xf32>
    %137 = arith.divf %135, %136 : vector<8x32xf32>
    %138 = vector.extract_strided_slice %118 {offsets = [0, 64], sizes = [8, 32], strides = [1, 1]} : vector<8x96xf32> to vector<8x32xf32>
    %139 = vector.extract_strided_slice %121 {offsets = [0, 64], sizes = [8, 32], strides = [1, 1]} : vector<8x96xf32> to vector<8x32xf32>
    %140 = arith.mulf %129, %139 : vector<8x32xf32>
    %141 = arith.addf %138, %140 : vector<8x32xf32>
    %142 = math.tanh %141 : vector<8x32xf32>
    %cst_38 = arith.constant 1.000000e+00 : f32
    %143 = vector.broadcast %cst_38 : f32 to vector<8x32xf32>
    %144 = arith.subf %143, %137 : vector<8x32xf32>
    %145 = arith.mulf %144, %142 : vector<8x32xf32>
    %146 = arith.mulf %137, %112 : vector<8x32xf32>
    %147 = arith.addf %145, %146 : vector<8x32xf32>
    %148 = arith.index_cast %116 : i32 to index
    %c0_39 = arith.constant 0 : index
    %149 = vector.load %arg12[%148, %c0_39] : memref<64x32xf32, #tpu.memory_space<vmem>>, vector<8x32xf32>
    tpu.vector_store %arg12[%148, %c0_39], %147 {strides = array<i32>} : memref<64x32xf32, #tpu.memory_space<vmem>>, vector<8x32xf32>,
    %c4_i32 = arith.constant 4 : i32
    %c8_i32_40 = arith.constant 8 : i32
    %150 = arith.muli %c4_i32, %c8_i32_40 : i32
    %151 = tpu.assume_multiple %150, 8 : i32
    %152 = arith.index_cast %151 : i32 to index
    %c0_41 = arith.constant 0 : index
    %153 = vector.load %arg11[%152, %c0_41] : memref<64x96xf32, #tpu.memory_space<vmem>>, vector<8x96xf32>
    %cst_42 = arith.constant dense<0.000000e+00> : vector<8x96xf32>
    %154 = tpu.matmul %147, %7, %cst_42 {dimension_numbers = #tpu.dot_dimension_numbers<[1], [0], [0], [1], [0, 0, 1, 1], [], []>} : vector<8x32xf32>, vector<32x96xf32>, vector<8x96xf32> -> vector<8x96xf32>
    %155 = vector.broadcast %8 : vector<1x96xf32> to vector<8x96xf32>
    %156 = arith.addf %154, %155 : vector<8x96xf32>
    %157 = vector.extract_strided_slice %153 {offsets = [0, 0], sizes = [8, 32], strides = [1, 1]} : vector<8x96xf32> to vector<8x32xf32>
    %158 = vector.extract_strided_slice %156 {offsets = [0, 0], sizes = [8, 32], strides = [1, 1]} : vector<8x96xf32> to vector<8x32xf32>
    %159 = arith.addf %157, %158 : vector<8x32xf32>
    %160 = arith.negf %159 : vector<8x32xf32>
    %161 = math.exp %160 : vector<8x32xf32>
    %cst_43 = arith.constant 1.000000e+00 : f32
    %162 = vector.broadcast %cst_43 : f32 to vector<8x32xf32>
    %163 = arith.addf %162, %161 : vector<8x32xf32>
    %164 = arith.divf %162, %163 : vector<8x32xf32>
    %165 = vector.extract_strided_slice %153 {offsets = [0, 32], sizes = [8, 32], strides = [1, 1]} : vector<8x96xf32> to vector<8x32xf32>
    %166 = vector.extract_strided_slice %156 {offsets = [0, 32], sizes = [8, 32], strides = [1, 1]} : vector<8x96xf32> to vector<8x32xf32>
    %167 = arith.addf %165, %166 : vector<8x32xf32>
    %168 = arith.negf %167 : vector<8x32xf32>
    %169 = math.exp %168 : vector<8x32xf32>
    %cst_44 = arith.constant 1.000000e+00 : f32
    %170 = vector.broadcast %cst_44 : f32 to vector<8x32xf32>
    %171 = arith.addf %170, %169 : vector<8x32xf32>
    %172 = arith.divf %170, %171 : vector<8x32xf32>
    %173 = vector.extract_strided_slice %153 {offsets = [0, 64], sizes = [8, 32], strides = [1, 1]} : vector<8x96xf32> to vector<8x32xf32>
    %174 = vector.extract_strided_slice %156 {offsets = [0, 64], sizes = [8, 32], strides = [1, 1]} : vector<8x96xf32> to vector<8x32xf32>
    %175 = arith.mulf %164, %174 : vector<8x32xf32>
    %176 = arith.addf %173, %175 : vector<8x32xf32>
    %177 = math.tanh %176 : vector<8x32xf32>
    %cst_45 = arith.constant 1.000000e+00 : f32
    %178 = vector.broadcast %cst_45 : f32 to vector<8x32xf32>
    %179 = arith.subf %178, %172 : vector<8x32xf32>
    %180 = arith.mulf %179, %177 : vector<8x32xf32>
    %181 = arith.mulf %172, %147 : vector<8x32xf32>
    %182 = arith.addf %180, %181 : vector<8x32xf32>
    %183 = arith.index_cast %151 : i32 to index
    %c0_46 = arith.constant 0 : index
    %184 = vector.load %arg12[%183, %c0_46] : memref<64x32xf32, #tpu.memory_space<vmem>>, vector<8x32xf32>
    tpu.vector_store %arg12[%183, %c0_46], %182 {strides = array<i32>} : memref<64x32xf32, #tpu.memory_space<vmem>>, vector<8x32xf32>,
    %c5_i32 = arith.constant 5 : i32
    %c8_i32_47 = arith.constant 8 : i32
    %185 = arith.muli %c5_i32, %c8_i32_47 : i32
    %186 = tpu.assume_multiple %185, 8 : i32
    %187 = arith.index_cast %186 : i32 to index
    %c0_48 = arith.constant 0 : index
    %188 = vector.load %arg11[%187, %c0_48] : memref<64x96xf32, #tpu.memory_space<vmem>>, vector<8x96xf32>
    %cst_49 = arith.constant dense<0.000000e+00> : vector<8x96xf32>
    %189 = tpu.matmul %182, %7, %cst_49 {dimension_numbers = #tpu.dot_dimension_numbers<[1], [0], [0], [1], [0, 0, 1, 1], [], []>} : vector<8x32xf32>, vector<32x96xf32>, vector<8x96xf32> -> vector<8x96xf32>
    %190 = vector.broadcast %8 : vector<1x96xf32> to vector<8x96xf32>
    %191 = arith.addf %189, %190 : vector<8x96xf32>
    %192 = vector.extract_strided_slice %188 {offsets = [0, 0], sizes = [8, 32], strides = [1, 1]} : vector<8x96xf32> to vector<8x32xf32>
    %193 = vector.extract_strided_slice %191 {offsets = [0, 0], sizes = [8, 32], strides = [1, 1]} : vector<8x96xf32> to vector<8x32xf32>
    %194 = arith.addf %192, %193 : vector<8x32xf32>
    %195 = arith.negf %194 : vector<8x32xf32>
    %196 = math.exp %195 : vector<8x32xf32>
    %cst_50 = arith.constant 1.000000e+00 : f32
    %197 = vector.broadcast %cst_50 : f32 to vector<8x32xf32>
    %198 = arith.addf %197, %196 : vector<8x32xf32>
    %199 = arith.divf %197, %198 : vector<8x32xf32>
    %200 = vector.extract_strided_slice %188 {offsets = [0, 32], sizes = [8, 32], strides = [1, 1]} : vector<8x96xf32> to vector<8x32xf32>
    %201 = vector.extract_strided_slice %191 {offsets = [0, 32], sizes = [8, 32], strides = [1, 1]} : vector<8x96xf32> to vector<8x32xf32>
    %202 = arith.addf %200, %201 : vector<8x32xf32>
    %203 = arith.negf %202 : vector<8x32xf32>
    %204 = math.exp %203 : vector<8x32xf32>
    %cst_51 = arith.constant 1.000000e+00 : f32
    %205 = vector.broadcast %cst_51 : f32 to vector<8x32xf32>
    %206 = arith.addf %205, %204 : vector<8x32xf32>
    %207 = arith.divf %205, %206 : vector<8x32xf32>
    %208 = vector.extract_strided_slice %188 {offsets = [0, 64], sizes = [8, 32], strides = [1, 1]} : vector<8x96xf32> to vector<8x32xf32>
    %209 = vector.extract_strided_slice %191 {offsets = [0, 64], sizes = [8, 32], strides = [1, 1]} : vector<8x96xf32> to vector<8x32xf32>
    %210 = arith.mulf %199, %209 : vector<8x32xf32>
    %211 = arith.addf %208, %210 : vector<8x32xf32>
    %212 = math.tanh %211 : vector<8x32xf32>
    %cst_52 = arith.constant 1.000000e+00 : f32
    %213 = vector.broadcast %cst_52 : f32 to vector<8x32xf32>
    %214 = arith.subf %213, %207 : vector<8x32xf32>
    %215 = arith.mulf %214, %212 : vector<8x32xf32>
    %216 = arith.mulf %207, %182 : vector<8x32xf32>
    %217 = arith.addf %215, %216 : vector<8x32xf32>
    %218 = arith.index_cast %186 : i32 to index
    %c0_53 = arith.constant 0 : index
    %219 = vector.load %arg12[%218, %c0_53] : memref<64x32xf32, #tpu.memory_space<vmem>>, vector<8x32xf32>
    tpu.vector_store %arg12[%218, %c0_53], %217 {strides = array<i32>} : memref<64x32xf32, #tpu.memory_space<vmem>>, vector<8x32xf32>,
    %c6_i32 = arith.constant 6 : i32
    %c8_i32_54 = arith.constant 8 : i32
    %220 = arith.muli %c6_i32, %c8_i32_54 : i32
    %221 = tpu.assume_multiple %220, 8 : i32
    %222 = arith.index_cast %221 : i32 to index
    %c0_55 = arith.constant 0 : index
    %223 = vector.load %arg11[%222, %c0_55] : memref<64x96xf32, #tpu.memory_space<vmem>>, vector<8x96xf32>
    %cst_56 = arith.constant dense<0.000000e+00> : vector<8x96xf32>
    %224 = tpu.matmul %217, %7, %cst_56 {dimension_numbers = #tpu.dot_dimension_numbers<[1], [0], [0], [1], [0, 0, 1, 1], [], []>} : vector<8x32xf32>, vector<32x96xf32>, vector<8x96xf32> -> vector<8x96xf32>
    %225 = vector.broadcast %8 : vector<1x96xf32> to vector<8x96xf32>
    %226 = arith.addf %224, %225 : vector<8x96xf32>
    %227 = vector.extract_strided_slice %223 {offsets = [0, 0], sizes = [8, 32], strides = [1, 1]} : vector<8x96xf32> to vector<8x32xf32>
    %228 = vector.extract_strided_slice %226 {offsets = [0, 0], sizes = [8, 32], strides = [1, 1]} : vector<8x96xf32> to vector<8x32xf32>
    %229 = arith.addf %227, %228 : vector<8x32xf32>
    %230 = arith.negf %229 : vector<8x32xf32>
    %231 = math.exp %230 : vector<8x32xf32>
    %cst_57 = arith.constant 1.000000e+00 : f32
    %232 = vector.broadcast %cst_57 : f32 to vector<8x32xf32>
    %233 = arith.addf %232, %231 : vector<8x32xf32>
    %234 = arith.divf %232, %233 : vector<8x32xf32>
    %235 = vector.extract_strided_slice %223 {offsets = [0, 32], sizes = [8, 32], strides = [1, 1]} : vector<8x96xf32> to vector<8x32xf32>
    %236 = vector.extract_strided_slice %226 {offsets = [0, 32], sizes = [8, 32], strides = [1, 1]} : vector<8x96xf32> to vector<8x32xf32>
    %237 = arith.addf %235, %236 : vector<8x32xf32>
    %238 = arith.negf %237 : vector<8x32xf32>
    %239 = math.exp %238 : vector<8x32xf32>
    %cst_58 = arith.constant 1.000000e+00 : f32
    %240 = vector.broadcast %cst_58 : f32 to vector<8x32xf32>
    %241 = arith.addf %240, %239 : vector<8x32xf32>
    %242 = arith.divf %240, %241 : vector<8x32xf32>
    %243 = vector.extract_strided_slice %223 {offsets = [0, 64], sizes = [8, 32], strides = [1, 1]} : vector<8x96xf32> to vector<8x32xf32>
    %244 = vector.extract_strided_slice %226 {offsets = [0, 64], sizes = [8, 32], strides = [1, 1]} : vector<8x96xf32> to vector<8x32xf32>
    %245 = arith.mulf %234, %244 : vector<8x32xf32>
    %246 = arith.addf %243, %245 : vector<8x32xf32>
    %247 = math.tanh %246 : vector<8x32xf32>
    %cst_59 = arith.constant 1.000000e+00 : f32
    %248 = vector.broadcast %cst_59 : f32 to vector<8x32xf32>
    %249 = arith.subf %248, %242 : vector<8x32xf32>
    %250 = arith.mulf %249, %247 : vector<8x32xf32>
    %251 = arith.mulf %242, %217 : vector<8x32xf32>
    %252 = arith.addf %250, %251 : vector<8x32xf32>
    %253 = arith.index_cast %221 : i32 to index
    %c0_60 = arith.constant 0 : index
    %254 = vector.load %arg12[%253, %c0_60] : memref<64x32xf32, #tpu.memory_space<vmem>>, vector<8x32xf32>
    tpu.vector_store %arg12[%253, %c0_60], %252 {strides = array<i32>} : memref<64x32xf32, #tpu.memory_space<vmem>>, vector<8x32xf32>,
    %c7_i32 = arith.constant 7 : i32
    %c8_i32_61 = arith.constant 8 : i32
    %255 = arith.muli %c7_i32, %c8_i32_61 : i32
    %256 = tpu.assume_multiple %255, 8 : i32
    %257 = arith.index_cast %256 : i32 to index
    %c0_62 = arith.constant 0 : index
    %258 = vector.load %arg11[%257, %c0_62] : memref<64x96xf32, #tpu.memory_space<vmem>>, vector<8x96xf32>
    %cst_63 = arith.constant dense<0.000000e+00> : vector<8x96xf32>
    %259 = tpu.matmul %252, %7, %cst_63 {dimension_numbers = #tpu.dot_dimension_numbers<[1], [0], [0], [1], [0, 0, 1, 1], [], []>} : vector<8x32xf32>, vector<32x96xf32>, vector<8x96xf32> -> vector<8x96xf32>
    %260 = vector.broadcast %8 : vector<1x96xf32> to vector<8x96xf32>
    %261 = arith.addf %259, %260 : vector<8x96xf32>
    %262 = vector.extract_strided_slice %258 {offsets = [0, 0], sizes = [8, 32], strides = [1, 1]} : vector<8x96xf32> to vector<8x32xf32>
    %263 = vector.extract_strided_slice %261 {offsets = [0, 0], sizes = [8, 32], strides = [1, 1]} : vector<8x96xf32> to vector<8x32xf32>
    %264 = arith.addf %262, %263 : vector<8x32xf32>
    %265 = arith.negf %264 : vector<8x32xf32>
    %266 = math.exp %265 : vector<8x32xf32>
    %cst_64 = arith.constant 1.000000e+00 : f32
    %267 = vector.broadcast %cst_64 : f32 to vector<8x32xf32>
    %268 = arith.addf %267, %266 : vector<8x32xf32>
    %269 = arith.divf %267, %268 : vector<8x32xf32>
    %270 = vector.extract_strided_slice %258 {offsets = [0, 32], sizes = [8, 32], strides = [1, 1]} : vector<8x96xf32> to vector<8x32xf32>
    %271 = vector.extract_strided_slice %261 {offsets = [0, 32], sizes = [8, 32], strides = [1, 1]} : vector<8x96xf32> to vector<8x32xf32>
    %272 = arith.addf %270, %271 : vector<8x32xf32>
    %273 = arith.negf %272 : vector<8x32xf32>
    %274 = math.exp %273 : vector<8x32xf32>
    %cst_65 = arith.constant 1.000000e+00 : f32
    %275 = vector.broadcast %cst_65 : f32 to vector<8x32xf32>
    %276 = arith.addf %275, %274 : vector<8x32xf32>
    %277 = arith.divf %275, %276 : vector<8x32xf32>
    %278 = vector.extract_strided_slice %258 {offsets = [0, 64], sizes = [8, 32], strides = [1, 1]} : vector<8x96xf32> to vector<8x32xf32>
    %279 = vector.extract_strided_slice %261 {offsets = [0, 64], sizes = [8, 32], strides = [1, 1]} : vector<8x96xf32> to vector<8x32xf32>
    %280 = arith.mulf %269, %279 : vector<8x32xf32>
    %281 = arith.addf %278, %280 : vector<8x32xf32>
    %282 = math.tanh %281 : vector<8x32xf32>
    %cst_66 = arith.constant 1.000000e+00 : f32
    %283 = vector.broadcast %cst_66 : f32 to vector<8x32xf32>
    %284 = arith.subf %283, %277 : vector<8x32xf32>
    %285 = arith.mulf %284, %282 : vector<8x32xf32>
    %286 = arith.mulf %277, %252 : vector<8x32xf32>
    %287 = arith.addf %285, %286 : vector<8x32xf32>
    %288 = arith.index_cast %256 : i32 to index
    %c0_67 = arith.constant 0 : index
    %289 = vector.load %arg12[%288, %c0_67] : memref<64x32xf32, #tpu.memory_space<vmem>>, vector<8x32xf32>
    tpu.vector_store %arg12[%288, %c0_67], %287 {strides = array<i32>} : memref<64x32xf32, #tpu.memory_space<vmem>>, vector<8x32xf32>,
    %c8_i32_68 = arith.constant 8 : i32
    %c0_69 = arith.constant 0 : index
    %c0_70 = arith.constant 0 : index
    %290 = vector.load %arg12[%c0_69, %c0_70] : memref<64x32xf32, #tpu.memory_space<vmem>>, vector<64x32xf32>
    %c0_71 = arith.constant 0 : index
    %c0_72 = arith.constant 0 : index
    %291 = vector.load %arg7[%c0_71, %c0_72] : memref<32x64xf32, #tpu.memory_space<vmem>>, vector<32x64xf32>
    %cst_73 = arith.constant dense<0.000000e+00> : vector<64x64xf32>
    %292 = tpu.matmul %290, %291, %cst_73 {dimension_numbers = #tpu.dot_dimension_numbers<[1], [0], [0], [1], [0, 0, 1, 1], [], []>} : vector<64x32xf32>, vector<32x64xf32>, vector<64x64xf32> -> vector<64x64xf32>
    %c0_74 = arith.constant 0 : index
    %c0_75 = arith.constant 0 : index
    %293 = vector.load %arg8[%c0_74, %c0_75] : memref<1x64xf32, #tpu.memory_space<vmem>>, vector<1x64xf32>
    %294 = vector.broadcast %293 : vector<1x64xf32> to vector<64x64xf32>
    %295 = arith.addf %292, %294 : vector<64x64xf32>
    %c0_76 = arith.constant 0 : index
    %c0_77 = arith.constant 0 : index
    %296 = vector.load %arg9[%c0_76, %c0_77] : memref<64x64xf32, #tpu.memory_space<vmem>>, vector<64x64xf32>
    tpu.vector_store %arg9[%c0_76, %c0_77], %295 {strides = array<i32>} : memref<64x64xf32, #tpu.memory_space<vmem>>, vector<64x64xf32>,
    %c0_78 = arith.constant 0 : index
    %c0_79 = arith.constant 0 : index
    %297 = vector.load %arg10[%c0_78, %c0_79] : memref<8x32xf32, #tpu.memory_space<vmem>>, vector<8x32xf32>
    tpu.vector_store %arg10[%c0_78, %c0_79], %287 {strides = array<i32>} : memref<8x32xf32, #tpu.memory_space<vmem>>, vector<8x32xf32>,
    return
  }
  func.func @transform_0(%arg0: i32) -> (i32, i32) {
    %c0_i32 = arith.constant 0 : i32
    %c0_i32_0 = arith.constant 0 : i32
    %c0_i32_1 = arith.constant 0 : i32
    return %c0_i32, %c0_i32_0 : i32, i32
  }
  func.func @transform_1(%arg0: i32) -> (i32, i32) {
    %c0_i32 = arith.constant 0 : i32
    %c0_i32_0 = arith.constant 0 : i32
    %c0_i32_1 = arith.constant 0 : i32
    return %c0_i32, %c0_i32_0 : i32, i32
  }
  func.func @transform_2(%arg0: i32) -> (i32, i32) {
    %c0_i32 = arith.constant 0 : i32
    %c0_i32_0 = arith.constant 0 : i32
    %c0_i32_1 = arith.constant 0 : i32
    return %c0_i32, %c0_i32_0 : i32, i32
  }
  func.func @transform_3(%arg0: i32) -> (i32, i32) {
    %c0_i32 = arith.constant 0 : i32
    %c0_i32_0 = arith.constant 0 : i32
    %c0_i32_1 = arith.constant 0 : i32
    return %c0_i32, %c0_i32_0 : i32, i32
  }
  func.func @transform_4(%arg0: i32) -> (i32, i32) {
    %c0_i32 = arith.constant 0 : i32
    %c0_i32_0 = arith.constant 0 : i32
    %c0_i32_1 = arith.constant 0 : i32
    return %c0_i32, %c0_i32_0 : i32, i32
  }
  func.func @transform_5(%arg0: i32) -> (i32, i32) {
    %c0_i32 = arith.constant 0 : i32
    %c0_i32_0 = arith.constant 0 : i32
    %c0_i32_1 = arith.constant 0 : i32
    return %c0_i32, %c0_i32_0 : i32, i32
  }
  func.func @transform_6(%arg0: i32) -> (i32, i32) {
    %c0_i32 = arith.constant 0 : i32
    %c0_i32_0 = arith.constant 0 : i32
    %c0_i32_1 = arith.constant 0 : i32
    return %c0_i32, %c0_i32_0 : i32, i32
  }
  func.func @transform_7(%arg0: i32) -> (i32, i32) {
    %c0_i32 = arith.constant 0 : i32
    %c0_i32_0 = arith.constant 0 : i32
    %c0_i32_1 = arith.constant 0 : i32
    return %c0_i32, %c0_i32_0 : i32, i32
  }
  func.func @transform_8(%arg0: i32) -> (i32, i32) {
    %c0_i32 = arith.constant 0 : i32
    %c0_i32_0 = arith.constant 0 : i32
    %c0_i32_1 = arith.constant 0 : i32
    return %c0_i32, %c0_i32_0 : i32, i32
  }
  func.func @transform_9(%arg0: i32) -> (i32, i32) {
    %c0_i32 = arith.constant 0 : i32
    %c0_i32_0 = arith.constant 0 : i32
    %c0_i32_1 = arith.constant 0 : i32
    return %c0_i32, %c0_i32_0 : i32, i32
  }
}

</mosaic_0001>

<llo_original>
// kernel: tpu_custom_call.1
$region0: #{tpu_custom_call.1}
  #allocation0 [shape = 'u32[]', space=smem, size = 0x4, offset = 0x4, fixed_abs, tag = 'smem constant byte address 0x4 - core index']
  #allocation1 [shape = 'u32[144,128]{1,0:T(1,128)}', space=vmem, size = 0x12000, scoped, tag = 'internal scratch']
  #allocation2 [shape = 'f32[64,96]{1,0:T(8,128)}', space=vmem, size = 0x8000, scoped, tag = 'scratch operand']
  #allocation3 [shape = 'f32[64,32]{1,0:T(8,128)}', space=vmem, size = 0x8000, scoped, tag = 'scratch operand']
  %s0 = inlined_call_operand.vmem [shape: f32[64,16], index: 0, kind: input, shape index: {}]
  %s1 = inlined_call_operand.hbm [shape: f32[8,32], index: 1, kind: input, shape index: {}]
  %s2 = inlined_call_operand.vmem [shape: f32[16,96], index: 2, kind: input, shape index: {}]
  %s3 = inlined_call_operand.vmem [shape: f32[32,96], index: 3, kind: input, shape index: {}]
  %s4 = inlined_call_operand.vmem [shape: f32[1,96], index: 4, kind: input, shape index: {}]
  %s5 = inlined_call_operand.vmem [shape: f32[1,96], index: 5, kind: input, shape index: {}]
  %s6 = inlined_call_operand.vmem [shape: f32[32,64], index: 6, kind: input, shape index: {}]
  %s7 = inlined_call_operand.vmem [shape: f32[1,64], index: 7, kind: input, shape index: {}]
  %s8 = inlined_call_operand.hbm [shape: f32[64,64], index: 8, kind: output, shape index: {0}]
  %s9 = inlined_call_operand.hbm [shape: f32[8,32], index: 9, kind: output, shape index: {1}]
  %10 = xla_tuple %s8, %s9
  %s11 = sld [smem:[#allocation0]]
  $region54: #{tpu_custom_call.1} parent=0
    _
  %s13 = ssub.s32 1, %s11
  %s14 = scalar_select 0, %s13, %s11
  $region1: #{tpu_custom_call.1} parent=0
    #allocation4 [shape = 'u8[4096]{0}', space=vmem, size = 0x1000, scoped, tag = 'input window, operand 1, single buffered']
    #allocation5 [shape = 's32[1]{0}', space=sflag, size = 0x4, scoped, tag = 'scoped memory for tpu_custom_call.1']
    #allocation6 [shape = 's32[1]{0}', space=sflag, size = 0x4, scoped, tag = 'scoped memory for tpu_custom_call.1']
    #allocation7 [shape = 'u8[32768]{0}', space=vmem, size = 0x8000, scoped, tag = 'output window, operand 0, single buffered']
    #allocation8 [shape = 'u8[4096]{0}', space=vmem, size = 0x1000, scoped, tag = 'output window, operand 1, single buffered']
    #allocation9 [shape = 's32[1]{0}', space=sflag, size = 0x4, scoped, tag = 'scoped memory for tpu_custom_call.1']
    %15 = vsyncpa [#allocation5], 0
    %16 = vsyncpa [#allocation6], 0
    %17 = vsyncpa [#allocation9], 0
    // Predicated region
    $region2: #{tpu_custom_call.1} parent=1 // pred_check
      _
    $region3: #{tpu_custom_call.1} parent=1 // pred_check_branch
      %19 = sbr.rel (0) target = $region5
    $region4: #{tpu_custom_call.1} parent=1 // pred_region
      _
    $region5: #{tpu_custom_call.1} parent=1 // pred_fallthru
      _
    // Predicated region
    $region6: #{tpu_custom_call.1} parent=1 // pred_check
      _
    $region7: #{tpu_custom_call.1} parent=1 // pred_check_branch
      %21 = sbr.rel (0) target = $region9
    $region8: #{tpu_custom_call.1} parent=1 // pred_region
      %s23 = ssub.s32 128, 128
      %24 = vsyncadd [#allocation5], %s23
      %s26 = sshll.u32 [#allocation4], 4
      %s27 = int_to_ptr.vmem [resolvable:$true] %s26
      %29 = dma.hbm_to_vmem [thread:$0]  %s1, 128, %s27, [#allocation5]
    $region9: #{tpu_custom_call.1} parent=1 // pred_fallthru
      _
    // Predicated region
    $region10: #{tpu_custom_call.1} parent=1 // pred_check
      _
    $region11: #{tpu_custom_call.1} parent=1 // pred_check_branch
      %31 = sbr.rel (0) target = $region13
    $region12: #{tpu_custom_call.1} parent=1 // pred_region
      _
    $region13: #{tpu_custom_call.1} parent=1 // pred_fallthru
      _
    // Predicated region
    $region14: #{tpu_custom_call.1} parent=1 // pred_check
      _
    $region15: #{tpu_custom_call.1} parent=1 // pred_check_branch
      %33 = sbr.rel (0) target = $region17
    $region16: #{tpu_custom_call.1} parent=1 // pred_region
      _
    $region17: #{tpu_custom_call.1} parent=1 // pred_fallthru
      _
    // Predicated region
    $region18: #{tpu_custom_call.1} parent=1 // pred_check
      _
    $region19: #{tpu_custom_call.1} parent=1 // pred_check_branch
      %35 = sbr.rel (0) target = $region21
    $region20: #{tpu_custom_call.1} parent=1 // pred_region
      _
    $region21: #{tpu_custom_call.1} parent=1 // pred_fallthru
      _
    // Predicated region
    $region22: #{tpu_custom_call.1} parent=1 // pred_check
      _
    $region23: #{tpu_custom_call.1} parent=1 // pred_check_branch
      %37 = sbr.rel (0) target = $region25
    $region24: #{tpu_custom_call.1} parent=1 // pred_region
      _
    $region25: #{tpu_custom_call.1} parent=1 // pred_fallthru
      _
    // Predicated region
    $region26: #{tpu_custom_call.1} parent=1 // pred_check
      _
    $region27: #{tpu_custom_call.1} parent=1 // pred_check_branch
      %39 = sbr.rel (0) target = $region29
    $region28: #{tpu_custom_call.1} parent=1 // pred_region
      _
    $region29: #{tpu_custom_call.1} parent=1 // pred_fallthru
      _
    // Predicated region
    $region30: #{tpu_custom_call.1} parent=1 // pred_check
      _
    $region31: #{tpu_custom_call.1} parent=1 // pred_check_branch
      %41 = sbr.rel (0) target = $region33
    $region32: #{tpu_custom_call.1} parent=1 // pred_region
      _
    $region33: #{tpu_custom_call.1} parent=1 // pred_fallthru
      _
    // Predicated region
    $region34: #{tpu_custom_call.1} parent=1 // pred_check
      _
    $region35: #{tpu_custom_call.1} parent=1 // pred_check_branch
      %43 = sbr.rel (0) target = $region37
    $region36: #{tpu_custom_call.1} parent=1 // pred_region
      %44 = dma.done [#allocation5], 128
    $region37: #{tpu_custom_call.1} parent=1 // pred_fallthru
      _
    %v45 = vld [vmem:[%s0] sm:$0xff]
    %v46 = vld [vmem:[%s0 + $0x8] sm:$0xff]
    %v47 = vld [vmem:[%s0 + $0x10] sm:$0xff]
    %v48 = vld [vmem:[%s0 + $0x18] sm:$0xff]
    %v49 = vld [vmem:[%s0 + $0x20] sm:$0xff]
    %v50 = vld [vmem:[%s0 + $0x28] sm:$0xff]
    %v51 = vld [vmem:[%s0 + $0x30] sm:$0xff]
    %v52 = vld [vmem:[%s0 + $0x38] sm:$0xff]
    %v53 = vld [vmem:[%s2] sm:$0xff]
    %v54 = vld [vmem:[%s2 + $0x8] sm:$0xff]
    %v55 = vld [vmem:[%s4] sm:$0x1]
    %v57 = vlaneseq
    %v58 = vshrl.u32 %v57, 7
    %v59 = vsub.s32 0, %v58
    %v60 = vrot.slane %v55, %v59
    %vm62 = vcmask 130048
    %v64 = vsel %vm62, %v45, 0
    %v67 = vsel %vm62, %v46, 0
    %v70 = vsel %vm62, %v47, 0
    %v73 = vsel %vm62, %v48, 0
    %v76 = vsel %vm62, %v49, 0
    %v79 = vsel %vm62, %v50, 0
    %v82 = vsel %vm62, %v51, 0
    %v85 = vsel %vm62, %v52, 0
    %87 = vmatprep.subr.mxu0 0.0
    %88 = vmatpush1.msra.mxu0 %v53
    %89 = vmatprep.subr.mxu0 0.0
    %90 = vmatpush1.msra.mxu0 %v54
    %91 = vmatprep.subr.mxu0 0.0
    %92 = vmatpush1.msra.mxu0 0.0
    %93 = vmatprep.subr.mxu0 0.0
    %94 = vmatpush1.msra.mxu0 0.0
    %95 = vmatprep.subr.mxu0 0.0
    %96 = vmatpush1.msra.mxu0 0.0
    %97 = vmatprep.subr.mxu0 0.0
    %98 = vmatpush1.msra.mxu0 0.0
    %99 = vmatprep.subr.mxu0 0.0
    %100 = vmatpush1.msra.mxu0 0.0
    %101 = vmatprep.subr.mxu0 0.0
    %102 = vmatpush1.msra.mxu0 0.0
    %103 = vmatprep.subr.mxu0 0.0
    %104 = vmatpush1.msra.mxu0 0.0
    %105 = vmatprep.subr.mxu0 0.0
    %106 = vmatpush1.msra.mxu0 0.0
    %107 = vmatprep.subr.mxu0 0.0
    %108 = vmatpush1.msra.mxu0 0.0
    %109 = vmatprep.subr.mxu0 0.0
    %110 = vmatpush1.msra.mxu0 0.0
    %111 = vmatprep.subr.mxu0 0.0
    %112 = vmatpush1.msra.mxu0 0.0
    %113 = vmatprep.subr.mxu0 0.0
    %114 = vmatpush1.msra.mxu0 0.0
    %115 = vmatprep.subr.mxu0 0.0
    %116 = vmatpush1.msra.mxu0 0.0
    %117 = vmatprep.subr.mxu0 0.0
    %118 = vmatpush1.msra.mxu0 0.0
    %119 = vmatprep.subr.mxu0 0.0
    %120 = vmatpush1.msra.mxu0 0.0
    %121 = vmatprep.subr.mxu0 0.0
    %122 = vmatpush1.msra.mxu0 0.0
    %123 = vmatprep.subr.mxu0 0.0
    %124 = vmatpush1.msra.mxu0 0.0
    %125 = vmatprep.subr.mxu0 0.0
    %126 = vmatpush1.msra.mxu0 0.0
    %127 = vmatprep.subr.mxu0 0.0
    %128 = vmatpush1.msra.mxu0 0.0
    %129 = vmatprep.subr.mxu0 0.0
    %130 = vmatpush1.msra.mxu0 0.0
    %131 = vmatprep.subr.mxu0 0.0
    %132 = vmatpush1.msra.mxu0 0.0
    %133 = vmatprep.subr.mxu0 0.0
    %134 = vmatpush1.msra.mxu0 0.0
    %135 = vmatprep.subr.mxu0 0.0
    %136 = vmatpush1.msra.mxu0 0.0
    %137 = vmatprep.subr.mxu0 0.0
    %138 = vmatpush1.msra.mxu0 0.0
    %139 = vmatprep.subr.mxu0 0.0
    %140 = vmatpush1.msra.mxu0 0.0
    %141 = vmatprep.subr.mxu0 0.0
    %142 = vmatpush1.msra.mxu0 0.0
    %143 = vmatprep.subr.mxu0 0.0
    %144 = vmatpush1.msra.mxu0 0.0
    %145 = vmatprep.subr.mxu0 0.0
    %146 = vmatpush1.msra.mxu0 0.0
    %147 = vmatprep.subr.mxu0 0.0
    %148 = vmatpush1.msra.mxu0 0.0
    %149 = vmatprep.subr.mxu0 0.0
    %150 = vmatpush1.msra.mxu0 0.0
    %151 = vmatprep.mubr.f32.mxu0 0.0
    %152 = vmatmul.mubr.f32.gmra.mrb[0].mxu0 %v64
    %v153 = vpop.f32.mrb[0].mxu0
    %v154 = vadd.f32 %v60, %v153
    %v155 = vpop.f32.mrb[0].mxu0
    %156 = vmatprep.mubr.f32.mxu0 0.0
    %157 = vmatmul.mubr.f32.gmra.mrb[0].mxu0 %v67
    %v158 = vpop.f32.mrb[0].mxu0
    %v159 = vadd.f32 %v60, %v158
    %v160 = vpop.f32.mrb[0].mxu0
    %161 = vmatprep.mubr.f32.mxu0 0.0
    %162 = vmatmul.mubr.f32.gmra.mrb[0].mxu0 %v70
    %v163 = vpop.f32.mrb[0].mxu0
    %v164 = vadd.f32 %v60, %v163
    %v165 = vpop.f32.mrb[0].mxu0
    %166 = vmatprep.mubr.f32.mxu0 0.0
    %167 = vmatmul.mubr.f32.gmra.mrb[0].mxu0 %v73
    %v168 = vpop.f32.mrb[0].mxu0
    %v169 = vadd.f32 %v60, %v168
    %v170 = vpop.f32.mrb[0].mxu0
    %171 = vmatprep.mubr.f32.mxu0 0.0
    %172 = vmatmul.mubr.f32.gmra.mrb[0].mxu0 %v76
    %v173 = vpop.f32.mrb[0].mxu0
    %v174 = vadd.f32 %v60, %v173
    %v175 = vpop.f32.mrb[0].mxu0
    %176 = vmatprep.mubr.f32.mxu0 0.0
    %177 = vmatmul.mubr.f32.gmra.mrb[0].mxu0 %v79
    %v178 = vpop.f32.mrb[0].mxu0
    %v179 = vadd.f32 %v60, %v178
    %v180 = vpop.f32.mrb[0].mxu0
    %181 = vmatprep.mubr.f32.mxu0 0.0
    %182 = vmatmul.mubr.f32.gmra.mrb[0].mxu0 %v82
    %v183 = vpop.f32.mrb[0].mxu0
    %v184 = vadd.f32 %v60, %v183
    %v185 = vpop.f32.mrb[0].mxu0
    %186 = vmatprep.mubr.f32.mxu0 0.0
    %187 = vmatmul.mubr.f32.gmra.mrb[0].mxu0 %v85
    %v188 = vpop.f32.mrb[0].mxu0
    %v189 = vadd.f32 %v60, %v188
    %v190 = vpop.f32.mrb[0].mxu0
    %191 = vdwg.mxu0
    %vm192 = vcmask 785408
    %193 = vst.msk [vmem:[#allocation2] sm:$0xff] %vm192, %v154
    %194 = vst.msk [vmem:[#allocation2 + $0x8] sm:$0xff] %vm192, %v159
    %195 = vst.msk [vmem:[#allocation2 + $0x10] sm:$0xff] %vm192, %v164
    %196 = vst.msk [vmem:[#allocation2 + $0x18] sm:$0xff] %vm192, %v169
    %197 = vst.msk [vmem:[#allocation2 + $0x20] sm:$0xff] %vm192, %v174
    %198 = vst.msk [vmem:[#allocation2 + $0x28] sm:$0xff] %vm192, %v179
    %199 = vst.msk [vmem:[#allocation2 + $0x30] sm:$0xff] %vm192, %v184
    %200 = vst.msk [vmem:[#allocation2 + $0x38] sm:$0xff] %vm192, %v189
    %v201 = vld [vmem:[%s3] sm:$0xff]
    %v202 = vld [vmem:[%s3 + $0x8] sm:$0xff]
    %v203 = vld [vmem:[%s3 + $0x10] sm:$0xff]
    %v204 = vld [vmem:[%s3 + $0x18] sm:$0xff]
    %v205 = vld [vmem:[%s5] sm:$0x1]
    %v206 = vld [vmem:[#allocation4] sm:$0xff]
    %v207 = vld [vmem:[#allocation2] sm:$0xff]
    %v209 = vlaneseq
    %v210 = vshrl.u32 %v209, 7
    %v211 = vsub.s32 0, %v210
    %v212 = vrot.slane %v205, %v211
    %vm214 = vcmask 261120
    %v216 = vsel %vm214, %v206, 0
    %218 = vmatprep.subr.mxu0 0.0
    %219 = vmatpush1.msra.mxu0 %v201
    %220 = vmatprep.subr.mxu0 0.0
    %221 = vmatpush1.msra.mxu0 %v202
    %222 = vmatprep.subr.mxu0 0.0
    %223 = vmatpush1.msra.mxu0 %v203
    %224 = vmatprep.subr.mxu0 0.0
    %225 = vmatpush1.msra.mxu0 %v204
    %226 = vmatprep.subr.mxu0 0.0
    %227 = vmatpush1.msra.mxu0 0.0
    %228 = vmatprep.subr.mxu0 0.0
    %229 = vmatpush1.msra.mxu0 0.0
    %230 = vmatprep.subr.mxu0 0.0
    %231 = vmatpush1.msra.mxu0 0.0
    %232 = vmatprep.subr.mxu0 0.0
    %233 = vmatpush1.msra.mxu0 0.0
    %234 = vmatprep.subr.mxu0 0.0
    %235 = vmatpush1.msra.mxu0 0.0
    %236 = vmatprep.subr.mxu0 0.0
    %237 = vmatpush1.msra.mxu0 0.0
    %238 = vmatprep.subr.mxu0 0.0
    %239 = vmatpush1.msra.mxu0 0.0
    %240 = vmatprep.subr.mxu0 0.0
    %241 = vmatpush1.msra.mxu0 0.0
    %242 = vmatprep.subr.mxu0 0.0
    %243 = vmatpush1.msra.mxu0 0.0
    %244 = vmatprep.subr.mxu0 0.0
    %245 = vmatpush1.msra.mxu0 0.0
    %246 = vmatprep.subr.mxu0 0.0
    %247 = vmatpush1.msra.mxu0 0.0
    %248 = vmatprep.subr.mxu0 0.0
    %249 = vmatpush1.msra.mxu0 0.0
    %250 = vmatprep.subr.mxu0 0.0
    %251 = vmatpush1.msra.mxu0 0.0
    %252 = vmatprep.subr.mxu0 0.0
    %253 = vmatpush1.msra.mxu0 0.0
    %254 = vmatprep.subr.mxu0 0.0
    %255 = vmatpush1.msra.mxu0 0.0
    %256 = vmatprep.subr.mxu0 0.0
    %257 = vmatpush1.msra.mxu0 0.0
    %258 = vmatprep.subr.mxu0 0.0
    %259 = vmatpush1.msra.mxu0 0.0
    %260 = vmatprep.subr.mxu0 0.0
    %261 = vmatpush1.msra.mxu0 0.0
    %262 = vmatprep.subr.mxu0 0.0
    %263 = vmatpush1.msra.mxu0 0.0
    %264 = vmatprep.subr.mxu0 0.0
    %265 = vmatpush1.msra.mxu0 0.0
    %266 = vmatprep.subr.mxu0 0.0
    %267 = vmatpush1.msra.mxu0 0.0
    %268 = vmatprep.subr.mxu0 0.0
    %269 = vmatpush1.msra.mxu0 0.0
    %270 = vmatprep.subr.mxu0 0.0
    %271 = vmatpush1.msra.mxu0 0.0
    %272 = vmatprep.subr.mxu0 0.0
    %273 = vmatpush1.msra.mxu0 0.0
    %274 = vmatprep.subr.mxu0 0.0
    %275 = vmatpush1.msra.mxu0 0.0
    %276 = vmatprep.subr.mxu0 0.0
    %277 = vmatpush1.msra.mxu0 0.0
    %278 = vmatprep.subr.mxu0 0.0
    %279 = vmatpush1.msra.mxu0 0.0
    %280 = vmatprep.subr.mxu0 0.0
    %281 = vmatpush1.msra.mxu0 0.0
    %282 = vmatprep.mubr.f32.mxu0 0.0
    %283 = vmatmul.mubr.f32.gmra.mrb[0].mxu0 %v216
    %v284 = vpop.f32.mrb[0].mxu0
    %v285 = vadd.f32 %v212, %v284
    %v286 = vpop.f32.mrb[0].mxu0
    %287 = vdwg.mxu0
    %v288 = vadd.f32 %v207, %v285
    %v289 = vxor.u32 %v288, 2147483648
    %v290 = vmul.f32 %v289, 1.442695
    %v291 = vpow.pop %v290
    %v292 = vadd.f32 %v291, 1.0
    %v293 = vrcp.pop %v292
    %v294 = vmul.f32 1.0, %v293
    %296 = vrot.lane.b32.xlu0 %v285, 64
    %v297 = vpop.permute.xlu0 %296
    %v299 = vmul.f32 %v294, %v297
    %301 = vrot.lane.b32.xlu0 %v299, 64
    %v302 = vpop.permute.xlu0 %301
    %v304 = vadd.f32 %v207, %v302
    %v305 = vtanh.pop %v304
    %v306 = vsub.f32 1.0, %v294
    %308 = vrot.lane.b32.xlu0 %v305, 96
    %v309 = vpop.permute.xlu0 %308
    %v311 = vmul.f32 %v306, %v309
    %312 = vrot.lane.b32.xlu0 %v206, 32
    %v313 = vpop.permute.xlu0 %312
    %v315 = vmul.f32 %v294, %v313
    %v316 = vadd.f32 %v311, %v315
    %318 = vrot.lane.b32.xlu0 %v316, 96
    %v319 = vpop.permute.xlu0 %318
    %321 = vst.msk [vmem:[#allocation3] sm:$0xff] %vm214, %v319
    %s322 = scalar_lea.vmem [#allocation2], 8
    %v323 = vld [vmem:[%s322] sm:$0xff]
    %v324 = vsel %vm214, %v319, 0
    %326 = vmatprep.subr.mxu0 0.0
    %327 = vmatpush1.msra.mxu0 %v201
    %328 = vmatprep.subr.mxu0 0.0
    %329 = vmatpush1.msra.mxu0 %v202
    %330 = vmatprep.subr.mxu0 0.0
    %331 = vmatpush1.msra.mxu0 %v203
    %332 = vmatprep.subr.mxu0 0.0
    %333 = vmatpush1.msra.mxu0 %v204
    %334 = vmatprep.subr.mxu0 0.0
    %335 = vmatpush1.msra.mxu0 0.0
    %336 = vmatprep.subr.mxu0 0.0
    %337 = vmatpush1.msra.mxu0 0.0
    %338 = vmatprep.subr.mxu0 0.0
    %339 = vmatpush1.msra.mxu0 0.0
    %340 = vmatprep.subr.mxu0 0.0
    %341 = vmatpush1.msra.mxu0 0.0
    %342 = vmatprep.subr.mxu0 0.0
    %343 = vmatpush1.msra.mxu0 0.0
    %344 = vmatprep.subr.mxu0 0.0
    %345 = vmatpush1.msra.mxu0 0.0
    %346 = vmatprep.subr.mxu0 0.0
    %347 = vmatpush1.msra.mxu0 0.0
    %348 = vmatprep.subr.mxu0 0.0
    %349 = vmatpush1.msra.mxu0 0.0
    %350 = vmatprep.subr.mxu0 0.0
    %351 = vmatpush1.msra.mxu0 0.0
    %352 = vmatprep.subr.mxu0 0.0
    %353 = vmatpush1.msra.mxu0 0.0
    %354 = vmatprep.subr.mxu0 0.0
    %355 = vmatpush1.msra.mxu0 0.0
    %356 = vmatprep.subr.mxu0 0.0
    %357 = vmatpush1.msra.mxu0 0.0
    %358 = vmatprep.subr.mxu0 0.0
    %359 = vmatpush1.msra.mxu0 0.0
    %360 = vmatprep.subr.mxu0 0.0
    %361 = vmatpush1.msra.mxu0 0.0
    %362 = vmatprep.subr.mxu0 0.0
    %363 = vmatpush1.msra.mxu0 0.0
    %364 = vmatprep.subr.mxu0 0.0
    %365 = vmatpush1.msra.mxu0 0.0
    %366 = vmatprep.subr.mxu0 0.0
    %367 = vmatpush1.msra.mxu0 0.0
    %368 = vmatprep.subr.mxu0 0.0
    %369 = vmatpush1.msra.mxu0 0.0
    %370 = vmatprep.subr.mxu0 0.0
    %371 = vmatpush1.msra.mxu0 0.0
    %372 = vmatprep.subr.mxu0 0.0
    %373 = vmatpush1.msra.mxu0 0.0
    %374 = vmatprep.subr.mxu0 0.0
    %375 = vmatpush1.msra.mxu0 0.0
    %376 = vmatprep.subr.mxu0 0.0
    %377 = vmatpush1.msra.mxu0 0.0
    %378 = vmatprep.subr.mxu0 0.0
    %379 = vmatpush1.msra.mxu0 0.0
    %380 = vmatprep.subr.mxu0 0.0
    %381 = vmatpush1.msra.mxu0 0.0
    %382 = vmatprep.subr.mxu0 0.0
    %383 = vmatpush1.msra.mxu0 0.0
    %384 = vmatprep.subr.mxu0 0.0
    %385 = vmatpush1.msra.mxu0 0.0
    %386 = vmatprep.subr.mxu0 0.0
    %387 = vmatpush1.msra.mxu0 0.0
    %388 = vmatprep.subr.mxu0 0.0
    %389 = vmatpush1.msra.mxu0 0.0
    %390 = vmatprep.mubr.f32.mxu0 0.0
    %391 = vmatmul.mubr.f32.gmra.mrb[0].mxu0 %v324
    %v392 = vpop.f32.mrb[0].mxu0
    %v393 = vadd.f32 %v212, %v392
    %v394 = vpop.f32.mrb[0].mxu0
    %395 = vdwg.mxu0
    %v396 = vadd.f32 %v323, %v393
    %v397 = vxor.u32 %v396, 2147483648
    %v398 = vmul.f32 %v397, 1.442695
    %v399 = vpow.pop %v398
    %v400 = vadd.f32 %v399, 1.0
    %v401 = vrcp.pop %v400
    %v402 = vmul.f32 1.0, %v401
    %404 = vrot.lane.b32.xlu0 %v393, 64
    %v405 = vpop.permute.xlu0 %404
    %v407 = vmul.f32 %v402, %v405
    %409 = vrot.lane.b32.xlu0 %v407, 64
    %v410 = vpop.permute.xlu0 %409
    %v412 = vadd.f32 %v323, %v410
    %v413 = vtanh.pop %v412
    %v414 = vsub.f32 1.0, %v402
    %416 = vrot.lane.b32.xlu0 %v413, 96
    %v417 = vpop.permute.xlu0 %416
    %v419 = vmul.f32 %v414, %v417
    %v420 = vmul.f32 %v402, %v316
    %v421 = vadd.f32 %v419, %v420
    %423 = vrot.lane.b32.xlu0 %v421, 96
    %v424 = vpop.permute.xlu0 %423
    %s426 = scalar_lea.vmem [#allocation3], 8
    %427 = vst.msk [vmem:[%s426] sm:$0xff] %vm214, %v424
    %s428 = scalar_lea.vmem [#allocation2], 16
    %v429 = vld [vmem:[%s428] sm:$0xff]
    %v430 = vsel %vm214, %v424, 0
    %432 = vmatprep.subr.mxu0 0.0
    %433 = vmatpush1.msra.mxu0 %v201
    %434 = vmatprep.subr.mxu0 0.0
    %435 = vmatpush1.msra.mxu0 %v202
    %436 = vmatprep.subr.mxu0 0.0
    %437 = vmatpush1.msra.mxu0 %v203
    %438 = vmatprep.subr.mxu0 0.0
    %439 = vmatpush1.msra.mxu0 %v204
    %440 = vmatprep.subr.mxu0 0.0
    %441 = vmatpush1.msra.mxu0 0.0
    %442 = vmatprep.subr.mxu0 0.0
    %443 = vmatpush1.msra.mxu0 0.0
    %444 = vmatprep.subr.mxu0 0.0
    %445 = vmatpush1.msra.mxu0 0.0
    %446 = vmatprep.subr.mxu0 0.0
    %447 = vmatpush1.msra.mxu0 0.0
    %448 = vmatprep.subr.mxu0 0.0
    %449 = vmatpush1.msra.mxu0 0.0
    %450 = vmatprep.subr.mxu0 0.0
    %451 = vmatpush1.msra.mxu0 0.0
    %452 = vmatprep.subr.mxu0 0.0
    %453 = vmatpush1.msra.mxu0 0.0
    %454 = vmatprep.subr.mxu0 0.0
    %455 = vmatpush1.msra.mxu0 0.0
    %456 = vmatprep.subr.mxu0 0.0
    %457 = vmatpush1.msra.mxu0 0.0
    %458 = vmatprep.subr.mxu0 0.0
    %459 = vmatpush1.msra.mxu0 0.0
    %460 = vmatprep.subr.mxu0 0.0
    %461 = vmatpush1.msra.mxu0 0.0
    %462 = vmatprep.subr.mxu0 0.0
    %463 = vmatpush1.msra.mxu0 0.0
    %464 = vmatprep.subr.mxu0 0.0
    %465 = vmatpush1.msra.mxu0 0.0
    %466 = vmatprep.subr.mxu0 0.0
    %467 = vmatpush1.msra.mxu0 0.0
    %468 = vmatprep.subr.mxu0 0.0
    %469 = vmatpush1.msra.mxu0 0.0
    %470 = vmatprep.subr.mxu0 0.0
    %471 = vmatpush1.msra.mxu0 0.0
    %472 = vmatprep.subr.mxu0 0.0
    %473 = vmatpush1.msra.mxu0 0.0
    %474 = vmatprep.subr.mxu0 0.0
    %475 = vmatpush1.msra.mxu0 0.0
    %476 = vmatprep.subr.mxu0 0.0
    %477 = vmatpush1.msra.mxu0 0.0
    %478 = vmatprep.subr.mxu0 0.0
    %479 = vmatpush1.msra.mxu0 0.0
    %480 = vmatprep.subr.mxu0 0.0
    %481 = vmatpush1.msra.mxu0 0.0
    %482 = vmatprep.subr.mxu0 0.0
    %483 = vmatpush1.msra.mxu0 0.0
    %484 = vmatprep.subr.mxu0 0.0
    %485 = vmatpush1.msra.mxu0 0.0
    %486 = vmatprep.subr.mxu0 0.0
    %487 = vmatpush1.msra.mxu0 0.0
    %488 = vmatprep.subr.mxu0 0.0
    %489 = vmatpush1.msra.mxu0 0.0
    %490 = vmatprep.subr.mxu0 0.0
    %491 = vmatpush1.msra.mxu0 0.0
    %492 = vmatprep.subr.mxu0 0.0
    %493 = vmatpush1.msra.mxu0 0.0
    %494 = vmatprep.subr.mxu0 0.0
    %495 = vmatpush1.msra.mxu0 0.0
    %496 = vmatprep.mubr.f32.mxu0 0.0
    %497 = vmatmul.mubr.f32.gmra.mrb[0].mxu0 %v430
    %v498 = vpop.f32.mrb[0].mxu0
    %v499 = vadd.f32 %v212, %v498
    %v500 = vpop.f32.mrb[0].mxu0
    %501 = vdwg.mxu0
    %v502 = vadd.f32 %v429, %v499
    %v503 = vxor.u32 %v502, 2147483648
    %v504 = vmul.f32 %v503, 1.442695
    %v505 = vpow.pop %v504
    %v506 = vadd.f32 %v505, 1.0
    %v507 = vrcp.pop %v506
    %v508 = vmul.f32 1.0, %v507
    %510 = vrot.lane.b32.xlu0 %v499, 64
    %v511 = vpop.permute.xlu0 %510
    %v513 = vmul.f32 %v508, %v511
    %515 = vrot.lane.b32.xlu0 %v513, 64
    %v516 = vpop.permute.xlu0 %515
    %v518 = vadd.f32 %v429, %v516
    %v519 = vtanh.pop %v518
    %v520 = vsub.f32 1.0, %v508
    %522 = vrot.lane.b32.xlu0 %v519, 96
    %v523 = vpop.permute.xlu0 %522
    %v525 = vmul.f32 %v520, %v523
    %v526 = vmul.f32 %v508, %v421
    %v527 = vadd.f32 %v525, %v526
    %529 = vrot.lane.b32.xlu0 %v527, 96
    %v530 = vpop.permute.xlu0 %529
    %s532 = scalar_lea.vmem [#allocation3], 16
    %533 = vst.msk [vmem:[%s532] sm:$0xff] %vm214, %v530
    %s534 = scalar_lea.vmem [#allocation2], 24
    %v535 = vld [vmem:[%s534] sm:$0xff]
    %v536 = vsel %vm214, %v530, 0
    %538 = vmatprep.subr.mxu0 0.0
    %539 = vmatpush1.msra.mxu0 %v201
    %540 = vmatprep.subr.mxu0 0.0
    %541 = vmatpush1.msra.mxu0 %v202
    %542 = vmatprep.subr.mxu0 0.0
    %543 = vmatpush1.msra.mxu0 %v203
    %544 = vmatprep.subr.mxu0 0.0
    %545 = vmatpush1.msra.mxu0 %v204
    %546 = vmatprep.subr.mxu0 0.0
    %547 = vmatpush1.msra.mxu0 0.0
    %548 = vmatprep.subr.mxu0 0.0
    %549 = vmatpush1.msra.mxu0 0.0
    %550 = vmatprep.subr.mxu0 0.0
    %551 = vmatpush1.msra.mxu0 0.0
    %552 = vmatprep.subr.mxu0 0.0
    %553 = vmatpush1.msra.mxu0 0.0
    %554 = vmatprep.subr.mxu0 0.0
    %555 = vmatpush1.msra.mxu0 0.0
    %556 = vmatprep.subr.mxu0 0.0
    %557 = vmatpush1.msra.mxu0 0.0
    %558 = vmatprep.subr.mxu0 0.0
    %559 = vmatpush1.msra.mxu0 0.0
    %560 = vmatprep.subr.mxu0 0.0
    %561 = vmatpush1.msra.mxu0 0.0
    %562 = vmatprep.subr.mxu0 0.0
    %563 = vmatpush1.msra.mxu0 0.0
    %564 = vmatprep.subr.mxu0 0.0
    %565 = vmatpush1.msra.mxu0 0.0
    %566 = vmatprep.subr.mxu0 0.0
    %567 = vmatpush1.msra.mxu0 0.0
    %568 = vmatprep.subr.mxu0 0.0
    %569 = vmatpush1.msra.mxu0 0.0
    %570 = vmatprep.subr.mxu0 0.0
    %571 = vmatpush1.msra.mxu0 0.0
    %572 = vmatprep.subr.mxu0 0.0
    %573 = vmatpush1.msra.mxu0 0.0
    %574 = vmatprep.subr.mxu0 0.0
    %575 = vmatpush1.msra.mxu0 0.0
    %576 = vmatprep.subr.mxu0 0.0
    %577 = vmatpush1.msra.mxu0 0.0
    %578 = vmatprep.subr.mxu0 0.0
    %579 = vmatpush1.msra.mxu0 0.0
    %580 = vmatprep.subr.mxu0 0.0
    %581 = vmatpush1.msra.mxu0 0.0
    %582 = vmatprep.subr.mxu0 0.0
    %583 = vmatpush1.msra.mxu0 0.0
    %584 = vmatprep.subr.mxu0 0.0
    %585 = vmatpush1.msra.mxu0 0.0
    %586 = vmatprep.subr.mxu0 0.0
    %587 = vmatpush1.msra.mxu0 0.0
    %588 = vmatprep.subr.mxu0 0.0
    %589 = vmatpush1.msra.mxu0 0.0
    %590 = vmatprep.subr.mxu0 0.0
    %591 = vmatpush1.msra.mxu0 0.0
    %592 = vmatprep.subr.mxu0 0.0
    %593 = vmatpush1.msra.mxu0 0.0
    %594 = vmatprep.subr.mxu0 0.0
    %595 = vmatpush1.msra.mxu0 0.0
    %596 = vmatprep.subr.mxu0 0.0
    %597 = vmatpush1.msra.mxu0 0.0
    %598 = vmatprep.subr.mxu0 0.0
    %599 = vmatpush1.msra.mxu0 0.0
    %600 = vmatprep.subr.mxu0 0.0
    %601 = vmatpush1.msra.mxu0 0.0
    %602 = vmatprep.mubr.f32.mxu0 0.0
    %603 = vmatmul.mubr.f32.gmra.mrb[0].mxu0 %v536
    %v604 = vpop.f32.mrb[0].mxu0
    %v605 = vadd.f32 %v212, %v604
    %v606 = vpop.f32.mrb[0].mxu0
    %607 = vdwg.mxu0
    %v608 = vadd.f32 %v535, %v605
    %v609 = vxor.u32 %v608, 2147483648
    %v610 = vmul.f32 %v609, 1.442695
    %v611 = vpow.pop %v610
    %v612 = vadd.f32 %v611, 1.0
    %v613 = vrcp.pop %v612
    %v614 = vmul.f32 1.0, %v613
    %616 = vrot.lane.b32.xlu0 %v605, 64
    %v617 = vpop.permute.xlu0 %616
    %v619 = vmul.f32 %v614, %v617
    %621 = vrot.lane.b32.xlu0 %v619, 64
    %v622 = vpop.permute.xlu0 %621
    %v624 = vadd.f32 %v535, %v622
    %v625 = vtanh.pop %v624
    %v626 = vsub.f32 1.0, %v614
    %628 = vrot.lane.b32.xlu0 %v625, 96
    %v629 = vpop.permute.xlu0 %628
    %v631 = vmul.f32 %v626, %v629
    %v632 = vmul.f32 %v614, %v527
    %v633 = vadd.f32 %v631, %v632
    %635 = vrot.lane.b32.xlu0 %v633, 96
    %v636 = vpop.permute.xlu0 %635
    %s638 = scalar_lea.vmem [#allocation3], 24
    %639 = vst.msk [vmem:[%s638] sm:$0xff] %vm214, %v636
    %s640 = scalar_lea.vmem [#allocation2], 32
    %v641 = vld [vmem:[%s640] sm:$0xff]
    %v642 = vsel %vm214, %v636, 0
    %644 = vmatprep.subr.mxu0 0.0
    %645 = vmatpush1.msra.mxu0 %v201
    %646 = vmatprep.subr.mxu0 0.0
    %647 = vmatpush1.msra.mxu0 %v202
    %648 = vmatprep.subr.mxu0 0.0
    %649 = vmatpush1.msra.mxu0 %v203
    %650 = vmatprep.subr.mxu0 0.0
    %651 = vmatpush1.msra.mxu0 %v204
    %652 = vmatprep.subr.mxu0 0.0
    %653 = vmatpush1.msra.mxu0 0.0
    %654 = vmatprep.subr.mxu0 0.0
    %655 = vmatpush1.msra.mxu0 0.0
    %656 = vmatprep.subr.mxu0 0.0
    %657 = vmatpush1.msra.mxu0 0.0
    %658 = vmatprep.subr.mxu0 0.0
    %659 = vmatpush1.msra.mxu0 0.0
    %660 = vmatprep.subr.mxu0 0.0
    %661 = vmatpush1.msra.mxu0 0.0
    %662 = vmatprep.subr.mxu0 0.0
    %663 = vmatpush1.msra.mxu0 0.0
    %664 = vmatprep.subr.mxu0 0.0
    %665 = vmatpush1.msra.mxu0 0.0
    %666 = vmatprep.subr.mxu0 0.0
    %667 = vmatpush1.msra.mxu0 0.0
    %668 = vmatprep.subr.mxu0 0.0
    %669 = vmatpush1.msra.mxu0 0.0
    %670 = vmatprep.subr.mxu0 0.0
    %671 = vmatpush1.msra.mxu0 0.0
    %672 = vmatprep.subr.mxu0 0.0
    %673 = vmatpush1.msra.mxu0 0.0
    %674 = vmatprep.subr.mxu0 0.0
    %675 = vmatpush1.msra.mxu0 0.0
    %676 = vmatprep.subr.mxu0 0.0
    %677 = vmatpush1.msra.mxu0 0.0
    %678 = vmatprep.subr.mxu0 0.0
    %679 = vmatpush1.msra.mxu0 0.0
    %680 = vmatprep.subr.mxu0 0.0
    %681 = vmatpush1.msra.mxu0 0.0
    %682 = vmatprep.subr.mxu0 0.0
    %683 = vmatpush1.msra.mxu0 0.0
    %684 = vmatprep.subr.mxu0 0.0
    %685 = vmatpush1.msra.mxu0 0.0
    %686 = vmatprep.subr.mxu0 0.0
    %687 = vmatpush1.msra.mxu0 0.0
    %688 = vmatprep.subr.mxu0 0.0
    %689 = vmatpush1.msra.mxu0 0.0
    %690 = vmatprep.subr.mxu0 0.0
    %691 = vmatpush1.msra.mxu0 0.0
    %692 = vmatprep.subr.mxu0 0.0
    %693 = vmatpush1.msra.mxu0 0.0
    %694 = vmatprep.subr.mxu0 0.0
    %695 = vmatpush1.msra.mxu0 0.0
    %696 = vmatprep.subr.mxu0 0.0
    %697 = vmatpush1.msra.mxu0 0.0
    %698 = vmatprep.subr.mxu0 0.0
    %699 = vmatpush1.msra.mxu0 0.0
    %700 = vmatprep.subr.mxu0 0.0
    %701 = vmatpush1.msra.mxu0 0.0
    %702 = vmatprep.subr.mxu0 0.0
    %703 = vmatpush1.msra.mxu0 0.0
    %704 = vmatprep.subr.mxu0 0.0
    %705 = vmatpush1.msra.mxu0 0.0
    %706 = vmatprep.subr.mxu0 0.0
    %707 = vmatpush1.msra.mxu0 0.0
    %708 = vmatprep.mubr.f32.mxu0 0.0
    %709 = vmatmul.mubr.f32.gmra.mrb[0].mxu0 %v642
    %v710 = vpop.f32.mrb[0].mxu0
    %v711 = vadd.f32 %v212, %v710
    %v712 = vpop.f32.mrb[0].mxu0
    %713 = vdwg.mxu0
    %v714 = vadd.f32 %v641, %v711
    %v715 = vxor.u32 %v714, 2147483648
    %v716 = vmul.f32 %v715, 1.442695
    %v717 = vpow.pop %v716
    %v718 = vadd.f32 %v717, 1.0
    %v719 = vrcp.pop %v718
    %v720 = vmul.f32 1.0, %v719
    %722 = vrot.lane.b32.xlu0 %v711, 64
    %v723 = vpop.permute.xlu0 %722
    %v725 = vmul.f32 %v720, %v723
    %727 = vrot.lane.b32.xlu0 %v725, 64
    %v728 = vpop.permute.xlu0 %727
    %v730 = vadd.f32 %v641, %v728
    %v731 = vtanh.pop %v730
    %v732 = vsub.f32 1.0, %v720
    %734 = vrot.lane.b32.xlu0 %v731, 96
    %v735 = vpop.permute.xlu0 %734
    %v737 = vmul.f32 %v732, %v735
    %v738 = vmul.f32 %v720, %v633
    %v739 = vadd.f32 %v737, %v738
    %741 = vrot.lane.b32.xlu0 %v739, 96
    %v742 = vpop.permute.xlu0 %741
    %s744 = scalar_lea.vmem [#allocation3], 32
    %745 = vst.msk [vmem:[%s744] sm:$0xff] %vm214, %v742
    %s746 = scalar_lea.vmem [#allocation2], 40
    %v747 = vld [vmem:[%s746] sm:$0xff]
    %v748 = vsel %vm214, %v742, 0
    %750 = vmatprep.subr.mxu0 0.0
    %751 = vmatpush1.msra.mxu0 %v201
    %752 = vmatprep.subr.mxu0 0.0
    %753 = vmatpush1.msra.mxu0 %v202
    %754 = vmatprep.subr.mxu0 0.0
    %755 = vmatpush1.msra.mxu0 %v203
    %756 = vmatprep.subr.mxu0 0.0
    %757 = vmatpush1.msra.mxu0 %v204
    %758 = vmatprep.subr.mxu0 0.0
    %759 = vmatpush1.msra.mxu0 0.0
    %760 = vmatprep.subr.mxu0 0.0
    %761 = vmatpush1.msra.mxu0 0.0
    %762 = vmatprep.subr.mxu0 0.0
    %763 = vmatpush1.msra.mxu0 0.0
    %764 = vmatprep.subr.mxu0 0.0
    %765 = vmatpush1.msra.mxu0 0.0
    %766 = vmatprep.subr.mxu0 0.0
    %767 = vmatpush1.msra.mxu0 0.0
    %768 = vmatprep.subr.mxu0 0.0
    %769 = vmatpush1.msra.mxu0 0.0
    %770 = vmatprep.subr.mxu0 0.0
    %771 = vmatpush1.msra.mxu0 0.0
    %772 = vmatprep.subr.mxu0 0.0
    %773 = vmatpush1.msra.mxu0 0.0
    %774 = vmatprep.subr.mxu0 0.0
    %775 = vmatpush1.msra.mxu0 0.0
    %776 = vmatprep.subr.mxu0 0.0
    %777 = vmatpush1.msra.mxu0 0.0
    %778 = vmatprep.subr.mxu0 0.0
    %779 = vmatpush1.msra.mxu0 0.0
    %780 = vmatprep.subr.mxu0 0.0
    %781 = vmatpush1.msra.mxu0 0.0
    %782 = vmatprep.subr.mxu0 0.0
    %783 = vmatpush1.msra.mxu0 0.0
    %784 = vmatprep.subr.mxu0 0.0
    %785 = vmatpush1.msra.mxu0 0.0
    %786 = vmatprep.subr.mxu0 0.0
    %787 = vmatpush1.msra.mxu0 0.0
    %788 = vmatprep.subr.mxu0 0.0
    %789 = vmatpush1.msra.mxu0 0.0
    %790 = vmatprep.subr.mxu0 0.0
    %791 = vmatpush1.msra.mxu0 0.0
    %792 = vmatprep.subr.mxu0 0.0
    %793 = vmatpush1.msra.mxu0 0.0
    %794 = vmatprep.subr.mxu0 0.0
    %795 = vmatpush1.msra.mxu0 0.0
    %796 = vmatprep.subr.mxu0 0.0
    %797 = vmatpush1.msra.mxu0 0.0
    %798 = vmatprep.subr.mxu0 0.0
    %799 = vmatpush1.msra.mxu0 0.0
    %800 = vmatprep.subr.mxu0 0.0
    %801 = vmatpush1.msra.mxu0 0.0
    %802 = vmatprep.subr.mxu0 0.0
    %803 = vmatpush1.msra.mxu0 0.0
    %804 = vmatprep.subr.mxu0 0.0
    %805 = vmatpush1.msra.mxu0 0.0
    %806 = vmatprep.subr.mxu0 0.0
    %807 = vmatpush1.msra.mxu0 0.0
    %808 = vmatprep.subr.mxu0 0.0
    %809 = vmatpush1.msra.mxu0 0.0
    %810 = vmatprep.subr.mxu0 0.0
    %811 = vmatpush1.msra.mxu0 0.0
    %812 = vmatprep.subr.mxu0 0.0
    %813 = vmatpush1.msra.mxu0 0.0
    %814 = vmatprep.mubr.f32.mxu0 0.0
    %815 = vmatmul.mubr.f32.gmra.mrb[0].mxu0 %v748
    %v816 = vpop.f32.mrb[0].mxu0
    %v817 = vadd.f32 %v212, %v816
    %v818 = vpop.f32.mrb[0].mxu0
    %819 = vdwg.mxu0
    %v820 = vadd.f32 %v747, %v817
    %v821 = vxor.u32 %v820, 2147483648
    %v822 = vmul.f32 %v821, 1.442695
    %v823 = vpow.pop %v822
    %v824 = vadd.f32 %v823, 1.0
    %v825 = vrcp.pop %v824
    %v826 = vmul.f32 1.0, %v825
    %828 = vrot.lane.b32.xlu0 %v817, 64
    %v829 = vpop.permute.xlu0 %828
    %v831 = vmul.f32 %v826, %v829
    %833 = vrot.lane.b32.xlu0 %v831, 64
    %v834 = vpop.permute.xlu0 %833
    %v836 = vadd.f32 %v747, %v834
    %v837 = vtanh.pop %v836
    %v838 = vsub.f32 1.0, %v826
    %840 = vrot.lane.b32.xlu0 %v837, 96
    %v841 = vpop.permute.xlu0 %840
    %v843 = vmul.f32 %v838, %v841
    %v844 = vmul.f32 %v826, %v739
    %v845 = vadd.f32 %v843, %v844
    %847 = vrot.lane.b32.xlu0 %v845, 96
    %v848 = vpop.permute.xlu0 %847
    %s850 = scalar_lea.vmem [#allocation3], 40
    %851 = vst.msk [vmem:[%s850] sm:$0xff] %vm214, %v848
    %s852 = scalar_lea.vmem [#allocation2], 48
    %v853 = vld [vmem:[%s852] sm:$0xff]
    %v854 = vsel %vm214, %v848, 0
    %856 = vmatprep.subr.mxu0 0.0
    %857 = vmatpush1.msra.mxu0 %v201
    %858 = vmatprep.subr.mxu0 0.0
    %859 = vmatpush1.msra.mxu0 %v202
    %860 = vmatprep.subr.mxu0 0.0
    %861 = vmatpush1.msra.mxu0 %v203
    %862 = vmatprep.subr.mxu0 0.0
    %863 = vmatpush1.msra.mxu0 %v204
    %864 = vmatprep.subr.mxu0 0.0
    %865 = vmatpush1.msra.mxu0 0.0
    %866 = vmatprep.subr.mxu0 0.0
    %867 = vmatpush1.msra.mxu0 0.0
    %868 = vmatprep.subr.mxu0 0.0
    %869 = vmatpush1.msra.mxu0 0.0
    %870 = vmatprep.subr.mxu0 0.0
    %871 = vmatpush1.msra.mxu0 0.0
    %872 = vmatprep.subr.mxu0 0.0
    %873 = vmatpush1.msra.mxu0 0.0
    %874 = vmatprep.subr.mxu0 0.0
    %875 = vmatpush1.msra.mxu0 0.0
    %876 = vmatprep.subr.mxu0 0.0
    %877 = vmatpush1.msra.mxu0 0.0
    %878 = vmatprep.subr.mxu0 0.0
    %879 = vmatpush1.msra.mxu0 0.0
    %880 = vmatprep.subr.mxu0 0.0
    %881 = vmatpush1.msra.mxu0 0.0
    %882 = vmatprep.subr.mxu0 0.0
    %883 = vmatpush1.msra.mxu0 0.0
    %884 = vmatprep.subr.mxu0 0.0
    %885 = vmatpush1.msra.mxu0 0.0
    %886 = vmatprep.subr.mxu0 0.0
    %887 = vmatpush1.msra.mxu0 0.0
    %888 = vmatprep.subr.mxu0 0.0
    %889 = vmatpush1.msra.mxu0 0.0
    %890 = vmatprep.subr.mxu0 0.0
    %891 = vmatpush1.msra.mxu0 0.0
    %892 = vmatprep.subr.mxu0 0.0
    %893 = vmatpush1.msra.mxu0 0.0
    %894 = vmatprep.subr.mxu0 0.0
    %895 = vmatpush1.msra.mxu0 0.0
    %896 = vmatprep.subr.mxu0 0.0
    %897 = vmatpush1.msra.mxu0 0.0
    %898 = vmatprep.subr.mxu0 0.0
    %899 = vmatpush1.msra.mxu0 0.0
    %900 = vmatprep.subr.mxu0 0.0
    %901 = vmatpush1.msra.mxu0 0.0
    %902 = vmatprep.subr.mxu0 0.0
    %903 = vmatpush1.msra.mxu0 0.0
    %904 = vmatprep.subr.mxu0 0.0
    %905 = vmatpush1.msra.mxu0 0.0
    %906 = vmatprep.subr.mxu0 0.0
    %907 = vmatpush1.msra.mxu0 0.0
    %908 = vmatprep.subr.mxu0 0.0
    %909 = vmatpush1.msra.mxu0 0.0
    %910 = vmatprep.subr.mxu0 0.0
    %911 = vmatpush1.msra.mxu0 0.0
    %912 = vmatprep.subr.mxu0 0.0
    %913 = vmatpush1.msra.mxu0 0.0
    %914 = vmatprep.subr.mxu0 0.0
    %915 = vmatpush1.msra.mxu0 0.0
    %916 = vmatprep.subr.mxu0 0.0
    %917 = vmatpush1.msra.mxu0 0.0
    %918 = vmatprep.subr.mxu0 0.0
    %919 = vmatpush1.msra.mxu0 0.0
    %920 = vmatprep.mubr.f32.mxu0 0.0
    %921 = vmatmul.mubr.f32.gmra.mrb[0].mxu0 %v854
    %v922 = vpop.f32.mrb[0].mxu0
    %v923 = vadd.f32 %v212, %v922
    %v924 = vpop.f32.mrb[0].mxu0
    %925 = vdwg.mxu0
    %v926 = vadd.f32 %v853, %v923
    %v927 = vxor.u32 %v926, 2147483648
    %v928 = vmul.f32 %v927, 1.442695
    %v929 = vpow.pop %v928
    %v930 = vadd.f32 %v929, 1.0
    %v931 = vrcp.pop %v930
    %v932 = vmul.f32 1.0, %v931
    %934 = vrot.lane.b32.xlu0 %v923, 64
    %v935 = vpop.permute.xlu0 %934
    %v937 = vmul.f32 %v932, %v935
    %939 = vrot.lane.b32.xlu0 %v937, 64
    %v940 = vpop.permute.xlu0 %939
    %v942 = vadd.f32 %v853, %v940
    %v943 = vtanh.pop %v942
    %v944 = vsub.f32 1.0, %v932
    %946 = vrot.lane.b32.xlu0 %v943, 96
    %v947 = vpop.permute.xlu0 %946
    %v949 = vmul.f32 %v944, %v947
    %v950 = vmul.f32 %v932, %v845
    %v951 = vadd.f32 %v949, %v950
    %953 = vrot.lane.b32.xlu0 %v951, 96
    %v954 = vpop.permute.xlu0 %953
    %s956 = scalar_lea.vmem [#allocation3], 48
    %957 = vst.msk [vmem:[%s956] sm:$0xff] %vm214, %v954
    %s958 = scalar_lea.vmem [#allocation2], 56
    %v959 = vld [vmem:[%s958] sm:$0xff]
    %v960 = vsel %vm214, %v954, 0
    %962 = vmatprep.subr.mxu0 0.0
    %963 = vmatpush1.msra.mxu0 %v201
    %964 = vmatprep.subr.mxu0 0.0
    %965 = vmatpush1.msra.mxu0 %v202
    %966 = vmatprep.subr.mxu0 0.0
    %967 = vmatpush1.msra.mxu0 %v203
    %968 = vmatprep.subr.mxu0 0.0
    %969 = vmatpush1.msra.mxu0 %v204
    %970 = vmatprep.subr.mxu0 0.0
    %971 = vmatpush1.msra.mxu0 0.0
    %972 = vmatprep.subr.mxu0 0.0
    %973 = vmatpush1.msra.mxu0 0.0
    %974 = vmatprep.subr.mxu0 0.0
    %975 = vmatpush1.msra.mxu0 0.0
    %976 = vmatprep.subr.mxu0 0.0
    %977 = vmatpush1.msra.mxu0 0.0
    %978 = vmatprep.subr.mxu0 0.0
    %979 = vmatpush1.msra.mxu0 0.0
    %980 = vmatprep.subr.mxu0 0.0
    %981 = vmatpush1.msra.mxu0 0.0
    %982 = vmatprep.subr.mxu0 0.0
    %983 = vmatpush1.msra.mxu0 0.0
    %984 = vmatprep.subr.mxu0 0.0
    %985 = vmatpush1.msra.mxu0 0.0
    %986 = vmatprep.subr.mxu0 0.0
    %987 = vmatpush1.msra.mxu0 0.0
    %988 = vmatprep.subr.mxu0 0.0
    %989 = vmatpush1.msra.mxu0 0.0
    %990 = vmatprep.subr.mxu0 0.0
    %991 = vmatpush1.msra.mxu0 0.0
    %992 = vmatprep.subr.mxu0 0.0
    %993 = vmatpush1.msra.mxu0 0.0
    %994 = vmatprep.subr.mxu0 0.0
    %995 = vmatpush1.msra.mxu0 0.0
    %996 = vmatprep.subr.mxu0 0.0
    %997 = vmatpush1.msra.mxu0 0.0
    %998 = vmatprep.subr.mxu0 0.0
    %999 = vmatpush1.msra.mxu0 0.0
    %1000 = vmatprep.subr.mxu0 0.0
    %1001 = vmatpush1.msra.mxu0 0.0
    %1002 = vmatprep.subr.mxu0 0.0
    %1003 = vmatpush1.msra.mxu0 0.0
    %1004 = vmatprep.subr.mxu0 0.0
    %1005 = vmatpush1.msra.mxu0 0.0
    %1006 = vmatprep.subr.mxu0 0.0
    %1007 = vmatpush1.msra.mxu0 0.0
    %1008 = vmatprep.subr.mxu0 0.0
    %1009 = vmatpush1.msra.mxu0 0.0
    %1010 = vmatprep.subr.mxu0 0.0
    %1011 = vmatpush1.msra.mxu0 0.0
    %1012 = vmatprep.subr.mxu0 0.0
    %1013 = vmatpush1.msra.mxu0 0.0
    %1014 = vmatprep.subr.mxu0 0.0
    %1015 = vmatpush1.msra.mxu0 0.0
    %1016 = vmatprep.subr.mxu0 0.0
    %1017 = vmatpush1.msra.mxu0 0.0
    %1018 = vmatprep.subr.mxu0 0.0
    %1019 = vmatpush1.msra.mxu0 0.0
    %1020 = vmatprep.subr.mxu0 0.0
    %1021 = vmatpush1.msra.mxu0 0.0
    %1022 = vmatprep.subr.mxu0 0.0
    %1023 = vmatpush1.msra.mxu0 0.0
    %1024 = vmatprep.subr.mxu0 0.0
    %1025 = vmatpush1.msra.mxu0 0.0
    %1026 = vmatprep.mubr.f32.mxu0 0.0
    %1027 = vmatmul.mubr.f32.gmra.mrb[0].mxu0 %v960
    %v1028 = vpop.f32.mrb[0].mxu0
    %v1029 = vadd.f32 %v212, %v1028
    %v1030 = vpop.f32.mrb[0].mxu0
    %1031 = vdwg.mxu0
    %v1032 = vadd.f32 %v959, %v1029
    %v1033 = vxor.u32 %v1032, 2147483648
    %v1034 = vmul.f32 %v1033, 1.442695
    %v1035 = vpow.pop %v1034
    %v1036 = vadd.f32 %v1035, 1.0
    %v1037 = vrcp.pop %v1036
    %v1038 = vmul.f32 1.0, %v1037
    %1040 = vrot.lane.b32.xlu0 %v1029, 64
    %v1041 = vpop.permute.xlu0 %1040
    %v1043 = vmul.f32 %v1038, %v1041
    %1045 = vrot.lane.b32.xlu0 %v1043, 64
    %v1046 = vpop.permute.xlu0 %1045
    %v1048 = vadd.f32 %v959, %v1046
    %v1049 = vtanh.pop %v1048
    %v1050 = vsub.f32 1.0, %v1038
    %1052 = vrot.lane.b32.xlu0 %v1049, 96
    %v1053 = vpop.permute.xlu0 %1052
    %v1055 = vmul.f32 %v1050, %v1053
    %v1056 = vmul.f32 %v1038, %v951
    %v1057 = vadd.f32 %v1055, %v1056
    %1059 = vrot.lane.b32.xlu0 %v1057, 96
    %v1060 = vpop.permute.xlu0 %1059
    %s1062 = scalar_lea.vmem [#allocation3], 56
    %1063 = vst.msk [vmem:[%s1062] sm:$0xff] %vm214, %v1060
    %v1064 = vld [vmem:[#allocation3] sm:$0xff]
    %v1065 = vld [vmem:[#allocation3 + $0x8] sm:$0xff]
    %v1066 = vld [vmem:[#allocation3 + $0x10] sm:$0xff]
    %v1067 = vld [vmem:[#allocation3 + $0x18] sm:$0xff]
    %v1068 = vld [vmem:[#allocation3 + $0x20] sm:$0xff]
    %v1069 = vld [vmem:[#allocation3 + $0x28] sm:$0xff]
    %v1070 = vld [vmem:[#allocation3 + $0x30] sm:$0xff]
    %v1071 = vld [vmem:[#allocation3 + $0x38] sm:$0xff]
    %v1072 = vld [vmem:[%s6] sm:$0xff]
    %v1073 = vld [vmem:[%s6 + $0x8] sm:$0xff]
    %v1074 = vld [vmem:[%s6 + $0x10] sm:$0xff]
    %v1075 = vld [vmem:[%s6 + $0x18] sm:$0xff]
    %v1076 = vld [vmem:[%s7] sm:$0x1]
    %v1078 = vlaneseq
    %v1079 = vshrl.u32 %v1078, 7
    %v1080 = vsub.s32 0, %v1079
    %v1081 = vrot.slane %v1076, %v1080
    %v1084 = vsel %vm214, %v1064, 0
    %v1087 = vsel %vm214, %v1065, 0
    %v1090 = vsel %vm214, %v1066, 0
    %v1093 = vsel %vm214, %v1067, 0
    %v1096 = vsel %vm214, %v1068, 0
    %v1099 = vsel %vm214, %v1069, 0
    %v1102 = vsel %vm214, %v1070, 0
    %v1105 = vsel %vm214, %v1071, 0
    %1107 = vmatprep.subr.mxu0 0.0
    %1108 = vmatpush1.msra.mxu0 %v1072
    %1109 = vmatprep.subr.mxu0 0.0
    %1110 = vmatpush1.msra.mxu0 %v1073
    %1111 = vmatprep.subr.mxu0 0.0
    %1112 = vmatpush1.msra.mxu0 %v1074
    %1113 = vmatprep.subr.mxu0 0.0
    %1114 = vmatpush1.msra.mxu0 %v1075
    %1115 = vmatprep.subr.mxu0 0.0
    %1116 = vmatpush1.msra.mxu0 0.0
    %1117 = vmatprep.subr.mxu0 0.0
    %1118 = vmatpush1.msra.mxu0 0.0
    %1119 = vmatprep.subr.mxu0 0.0
    %1120 = vmatpush1.msra.mxu0 0.0
    %1121 = vmatprep.subr.mxu0 0.0
    %1122 = vmatpush1.msra.mxu0 0.0
    %1123 = vmatprep.subr.mxu0 0.0
    %1124 = vmatpush1.msra.mxu0 0.0
    %1125 = vmatprep.subr.mxu0 0.0
    %1126 = vmatpush1.msra.mxu0 0.0
    %1127 = vmatprep.subr.mxu0 0.0
    %1128 = vmatpush1.msra.mxu0 0.0
    %1129 = vmatprep.subr.mxu0 0.0
    %1130 = vmatpush1.msra.mxu0 0.0
    %1131 = vmatprep.subr.mxu0 0.0
    %1132 = vmatpush1.msra.mxu0 0.0
    %1133 = vmatprep.subr.mxu0 0.0
    %1134 = vmatpush1.msra.mxu0 0.0
    %1135 = vmatprep.subr.mxu0 0.0
    %1136 = vmatpush1.msra.mxu0 0.0
    %1137 = vmatprep.subr.mxu0 0.0
    %1138 = vmatpush1.msra.mxu0 0.0
    %1139 = vmatprep.subr.mxu0 0.0
    %1140 = vmatpush1.msra.mxu0 0.0
    %1141 = vmatprep.subr.mxu0 0.0
    %1142 = vmatpush1.msra.mxu0 0.0
    %1143 = vmatprep.subr.mxu0 0.0
    %1144 = vmatpush1.msra.mxu0 0.0
    %1145 = vmatprep.subr.mxu0 0.0
    %1146 = vmatpush1.msra.mxu0 0.0
    %1147 = vmatprep.subr.mxu0 0.0
    %1148 = vmatpush1.msra.mxu0 0.0
    %1149 = vmatprep.subr.mxu0 0.0
    %1150 = vmatpush1.msra.mxu0 0.0
    %1151 = vmatprep.subr.mxu0 0.0
    %1152 = vmatpush1.msra.mxu0 0.0
    %1153 = vmatprep.subr.mxu0 0.0
    %1154 = vmatpush1.msra.mxu0 0.0
    %1155 = vmatprep.subr.mxu0 0.0
    %1156 = vmatpush1.msra.mxu0 0.0
    %1157 = vmatprep.subr.mxu0 0.0
    %1158 = vmatpush1.msra.mxu0 0.0
    %1159 = vmatprep.subr.mxu0 0.0
    %1160 = vmatpush1.msra.mxu0 0.0
    %1161 = vmatprep.subr.mxu0 0.0
    %1162 = vmatpush1.msra.mxu0 0.0
    %1163 = vmatprep.subr.mxu0 0.0
    %1164 = vmatpush1.msra.mxu0 0.0
    %1165 = vmatprep.subr.mxu0 0.0
    %1166 = vmatpush1.msra.mxu0 0.0
    %1167 = vmatprep.subr.mxu0 0.0
    %1168 = vmatpush1.msra.mxu0 0.0
    %1169 = vmatprep.subr.mxu0 0.0
    %1170 = vmatpush1.msra.mxu0 0.0
    %1171 = vmatprep.mubr.f32.mxu0 0.0
    %1172 = vmatmul.mubr.f32.gmra.mrb[0].mxu0 %v1084
    %v1173 = vpop.f32.mrb[0].mxu0
    %v1174 = vadd.f32 %v1081, %v1173
    %v1175 = vpop.f32.mrb[0].mxu0
    %1176 = vmatprep.mubr.f32.mxu0 0.0
    %1177 = vmatmul.mubr.f32.gmra.mrb[0].mxu0 %v1087
    %v1178 = vpop.f32.mrb[0].mxu0
    %v1179 = vadd.f32 %v1081, %v1178
    %v1180 = vpop.f32.mrb[0].mxu0
    %1181 = vmatprep.mubr.f32.mxu0 0.0
    %1182 = vmatmul.mubr.f32.gmra.mrb[0].mxu0 %v1090
    %v1183 = vpop.f32.mrb[0].mxu0
    %v1184 = vadd.f32 %v1081, %v1183
    %v1185 = vpop.f32.mrb[0].mxu0
    %1186 = vmatprep.mubr.f32.mxu0 0.0
    %1187 = vmatmul.mubr.f32.gmra.mrb[0].mxu0 %v1093
    %v1188 = vpop.f32.mrb[0].mxu0
    %v1189 = vadd.f32 %v1081, %v1188
    %v1190 = vpop.f32.mrb[0].mxu0
    %1191 = vmatprep.mubr.f32.mxu0 0.0
    %1192 = vmatmul.mubr.f32.gmra.mrb[0].mxu0 %v1096
    %v1193 = vpop.f32.mrb[0].mxu0
    %v1194 = vadd.f32 %v1081, %v1193
    %v1195 = vpop.f32.mrb[0].mxu0
    %1196 = vmatprep.mubr.f32.mxu0 0.0
    %1197 = vmatmul.mubr.f32.gmra.mrb[0].mxu0 %v1099
    %v1198 = vpop.f32.mrb[0].mxu0
    %v1199 = vadd.f32 %v1081, %v1198
    %v1200 = vpop.f32.mrb[0].mxu0
    %1201 = vmatprep.mubr.f32.mxu0 0.0
    %1202 = vmatmul.mubr.f32.gmra.mrb[0].mxu0 %v1102
    %v1203 = vpop.f32.mrb[0].mxu0
    %v1204 = vadd.f32 %v1081, %v1203
    %v1205 = vpop.f32.mrb[0].mxu0
    %1206 = vmatprep.mubr.f32.mxu0 0.0
    %1207 = vmatmul.mubr.f32.gmra.mrb[0].mxu0 %v1105
    %v1208 = vpop.f32.mrb[0].mxu0
    %v1209 = vadd.f32 %v1081, %v1208
    %v1210 = vpop.f32.mrb[0].mxu0
    %1211 = vdwg.mxu0
    %vm1212 = vcmask 523264
    %1213 = vst.msk [vmem:[#allocation7] sm:$0xff] %vm1212, %v1174
    %1214 = vst.msk [vmem:[#allocation7 + $0x8] sm:$0xff] %vm1212, %v1179
    %1215 = vst.msk [vmem:[#allocation7 + $0x10] sm:$0xff] %vm1212, %v1184
    %1216 = vst.msk [vmem:[#allocation7 + $0x18] sm:$0xff] %vm1212, %v1189
    %1217 = vst.msk [vmem:[#allocation7 + $0x20] sm:$0xff] %vm1212, %v1194
    %1218 = vst.msk [vmem:[#allocation7 + $0x28] sm:$0xff] %vm1212, %v1199
    %1219 = vst.msk [vmem:[#allocation7 + $0x30] sm:$0xff] %vm1212, %v1204
    %1220 = vst.msk [vmem:[#allocation7 + $0x38] sm:$0xff] %vm1212, %v1209
    %1221 = vst.msk [vmem:[#allocation8] sm:$0xff] %vm214, %v1060
    // Predicated region
    $region38: #{tpu_custom_call.1} parent=1 // pred_check
      _
    $region39: #{tpu_custom_call.1} parent=1 // pred_check_branch
      %1223 = sbr.rel (0) target = $region41
    $region40: #{tpu_custom_call.1} parent=1 // pred_region
      %s1225 = ssub.s32 1024, 1024
      %1226 = vsyncadd [#allocation6], %s1225
      %s1227 = sshll.u32 [#allocation7], 4
      %s1228 = int_to_ptr.vmem [resolvable:$true] %s1227
      %1233 = dma.vmem_to_hbm [thread:$0]  %s1228, 1024, %s8, [#allocation6], 128, 128, 8
    $region41: #{tpu_custom_call.1} parent=1 // pred_fallthru
      _
    // Predicated region
    $region42: #{tpu_custom_call.1} parent=1 // pred_check
      _
    $region43: #{tpu_custom_call.1} parent=1 // pred_check_branch
      %1235 = sbr.rel (0) target = $region45
    $region44: #{tpu_custom_call.1} parent=1 // pred_region
      %s1237 = ssub.s32 128, 128
      %1238 = vsyncadd [#allocation9], %s1237
      %s1240 = sshll.u32 [#allocation8], 4
      %s1241 = int_to_ptr.vmem [resolvable:$true] %s1240
      %1243 = dma.vmem_to_hbm [thread:$0]  %s1241, 128, %s9, [#allocation9]
    $region45: #{tpu_custom_call.1} parent=1 // pred_fallthru
      _
    // Predicated region
    $region46: #{tpu_custom_call.1} parent=1 // pred_check
      _
    $region47: #{tpu_custom_call.1} parent=1 // pred_check_branch
      %1245 = sbr.rel (0) target = $region49
    $region48: #{tpu_custom_call.1} parent=1 // pred_region
      %1246 = dma.done [#allocation6], 1024
    $region49: #{tpu_custom_call.1} parent=1 // pred_fallthru
      _
    // Predicated region
    $region50: #{tpu_custom_call.1} parent=1 // pred_check
      _
    $region51: #{tpu_custom_call.1} parent=1 // pred_check_branch
      %1248 = sbr.rel (0) target = $region53
    $region52: #{tpu_custom_call.1} parent=1 // pred_region
      %1249 = dma.done [#allocation9], 128
    $region53: #{tpu_custom_call.1} parent=1 // pred_fallthru
      _
    %1250 = vsyncpa [#allocation5], 1
    %1251 = vsyncpa [#allocation6], 1
    %1252 = vsyncpa [#allocation9], 1

</llo_original>
